<compile_context>
chip_gen: v5e
topology: v5e:2x2
jax: 0.10.0
libtpu: 0.0.40
codegen_flags: <defaults>
</compile_context>

<pallas_src>
import functools

import jax
import jax.numpy as jnp
from jax.experimental import pallas as pl
from jax.experimental.pallas import tpu as pltpu


def weld_lstm_kernel(x_ref, wih_ref, bg_ref, whh_ref, wout_ref, bout_ref,
                     y_ref, xg_ref, h_ref, *, batch):
    """Single-dispatch WeldLSTM forward.

    x_ref:    (T*B, I)  f32  time-major flattened inputs
    wih_ref:  (I, 4H)   f32  input->hidden weights, gate blocks [i|f|g|o] in lanes
    bg_ref:   (1, 4H)   f32  b_ih + b_hh
    whh_ref:  (H, 4H)   bf16 hidden->hidden weights (fused gate blocks)
    wout_ref: (H, O)    f32  output projection
    bout_ref: (1, O)    f32
    y_ref:    (T*B, O)  f32  output
    xg_ref:   (T*B, 4H) f32  scratch: precomputed input projection
    h_ref:    (T*B, H)  f32  scratch: per-step hidden states
    """
    TB = x_ref.shape[0]
    H = whh_ref.shape[0]
    B = batch
    T = TB // B

    # (1) Hoisted input projection for the whole sequence: ONE matmul, off the
    #     serial path.  Gate g lives in lane block [g*H:(g+1)*H].
    xg_ref[...] = (
        jnp.dot(x_ref[...], wih_ref[...], preferred_element_type=jnp.float32)
        + bg_ref[...]
    )

    def step(t, carry):
        h, c = carry
        row = pl.multiple_of(t * B, B)          # sublane-aligned dynamic slice
        # (2) Fused gate matmul: one (B, H) x (H, 4H) bf16 MXU op per step,
        #     RHS streamed straight from VMEM (not vreg-hoisted).
        gates = xg_ref[pl.ds(row, B), :] + jnp.dot(
            h.astype(jnp.bfloat16), whh_ref[...],
            preferred_element_type=jnp.float32)
        # Lane-aligned static 128-wide gate slices; all elementwise math in f32.
        i_t = jax.nn.sigmoid(gates[:, 0 * H:1 * H])
        f_t = jax.nn.sigmoid(gates[:, 1 * H:2 * H])
        g_t = jnp.tanh(gates[:, 2 * H:3 * H])
        o_t = jax.nn.sigmoid(gates[:, 3 * H:4 * H])
        c_new = f_t * c + i_t * g_t
        h_new = o_t * jnp.tanh(c_new)
        h_ref[pl.ds(row, B), :] = h_new         # lane-dense (B, H) store
        return h_new, c_new

    zeros = jnp.zeros((B, H), jnp.float32)
    # Short static trip count -> fully unrolled for LLO scheduler visibility.
    # (Switch to unroll=4 / a T-chunked grid if T grows large.)
    jax.lax.fori_loop(0, T, step, (zeros, zeros), unroll=True)

    # (3) Deferred output projection (H -> O, O=1): once, off the serial path.
    y_ref[...] = (
        jnp.dot(h_ref[...], wout_ref[...], preferred_element_type=jnp.float32)
        + bout_ref[...]
    )


def weld_lstm_forward(src, params):
    """Training-path forward: output = linear(lstm(src)).

    src: (B, T, I) float32 (batch_first, like the PyTorch module)
    returns: (B, T, O) float32
    """
    B, T, I = src.shape
    H = params["w_hh"].shape[0]
    O = params["w_out"].shape[1]

    # Time-major flatten (layout plumbing only; everything else is in-kernel).
    x_flat = jnp.transpose(src, (1, 0, 2)).reshape(T * B, I).astype(jnp.float32)
    w_ih = params["w_ih"].astype(jnp.float32)                       # (I, 4H)
    b_g = (params["b_ih"] + params["b_hh"]).reshape(1, 4 * H).astype(jnp.float32)
    w_hh = params["w_hh"].astype(jnp.bfloat16)                      # (H, 4H) bf16
    w_out = params["w_out"].astype(jnp.float32)                     # (H, O)
    b_out = params["b_out"].reshape(1, O).astype(jnp.float32)

    kernel = functools.partial(weld_lstm_kernel, batch=B)
    y_flat = pl.pallas_call(
        kernel,
        out_shape=jax.ShapeDtypeStruct((T * B, O), jnp.float32),
        in_specs=[pl.BlockSpec(memory_space=pltpu.MemorySpace.VMEM)] * 6,
        out_specs=pl.BlockSpec(memory_space=pltpu.MemorySpace.VMEM),
        scratch_shapes=[
            pltpu.VMEM((T * B, 4 * H), jnp.float32),   # xg: input projection
            pltpu.VMEM((T * B, H), jnp.float32),       # per-step hidden states
        ],
    )(x_flat, w_ih, b_g, w_hh, w_out, b_out)

    return jnp.transpose(y_flat.reshape(T, B, O), (1, 0, 2))        # (B, T, O)


def weld_lstm_reference(src, params):
    """Pure-JAX reference (lax.scan over flat weights) for correctness checking."""
    B, T, I = src.shape
    H = params["w_hh"].shape[0]
    b = (params["b_ih"] + params["b_hh"])[None, :]

    def step(carry, x_t):
        h, c = carry
        gates = x_t @ params["w_ih"] + h @ params["w_hh"] + b
        i_g = jax.nn.sigmoid(gates[:, 0 * H:1 * H])
        f_g = jax.nn.sigmoid(gates[:, 1 * H:2 * H])
        g_g = jnp.tanh(gates[:, 2 * H:3 * H])
        o_g = jax.nn.sigmoid(gates[:, 3 * H:4 * H])
        c_new = f_g * c + i_g * g_g
        h_new = o_g * jnp.tanh(c_new)
        y = h_new @ params["w_out"] + params["b_out"][None, :]
        return (h_new, c_new), y

    h0 = jnp.zeros((B, H), jnp.float32)
    c0 = jnp.zeros((B, H), jnp.float32)
    _, ys = jax.lax.scan(step, (h0, c0), jnp.transpose(src, (1, 0, 2)))
    return jnp.transpose(ys, (1, 0, 2))


def init_params(key, input_size, hidden_size, output_size):
    """Deterministic init matching PyTorch shapes (stored pre-transposed)."""
    k = 1.0 / jnp.sqrt(hidden_size)
    keys = jax.random.split(key, 6)
    return {
        # PyTorch weight_ih_l0 is (4H, I); we store (I, 4H), gate order i,f,g,o.
        "w_ih": jax.random.uniform(keys[0], (input_size, 4 * hidden_size),
                                   jnp.float32, -k, k),
        # PyTorch weight_hh_l0 is (4H, H); we store (H, 4H).
        "w_hh": jax.random.uniform(keys[1], (hidden_size, 4 * hidden_size),
                                   jnp.float32, -k, k),
        "b_ih": jax.random.uniform(keys[2], (4 * hidden_size,),
                                   jnp.float32, -k, k),
        "b_hh": jax.random.uniform(keys[3], (4 * hidden_size,),
                                   jnp.float32, -k, k),
        # PyTorch Linear weight is (O, H); we store (H, O).
        "w_out": jax.random.uniform(keys[4], (hidden_size, output_size),
                                    jnp.float32, -k, k),
        "b_out": jax.random.uniform(keys[5], (output_size,),
                                    jnp.float32, -k, k),
    }


if __name__ == "__main__":
    # Small shapes consistent with the module (input_size=6, output_size=1),
    # batch = 8 (sublane-full) and hidden = 128 (lane-full, one MXU tile).
    B, T, I, H, O = 8, 8, 6, 128, 1

    key = jax.random.PRNGKey(0)
    k_x, k_p = jax.random.split(key)
    src = jax.random.normal(k_x, (B, T, I), jnp.float32)
    params = init_params(k_p, I, H, O)

    fwd = jax.jit(weld_lstm_forward)
    out = jax.block_until_ready(fwd(src, params))

    ref = weld_lstm_reference(src, params)
    assert out.shape == (B, T, O)
    # Tolerance accounts for the intentional bf16 MXU-operand path on the
    # recurrence matmul (f32 accumulation, f32 elementwise gate math).
    assert jnp.allclose(out, ref, atol=2e-3, rtol=2e-3), "mismatch vs reference"

    print("KERNEL_OK")
</pallas_src>

<mosaic_0001>
module attributes {stable_mosaic.version = 11 : i64} {
  func.func @weld_lstm_kernel(%arg0: memref<64x6xf32, #tpu.memory_space<vmem>>, %arg1: memref<6x512xf32, #tpu.memory_space<vmem>>, %arg2: memref<1x512xf32, #tpu.memory_space<vmem>>, %arg3: memref<128x512xbf16, #tpu.memory_space<vmem>>, %arg4: memref<128x1xf32, #tpu.memory_space<vmem>>, %arg5: memref<1x1xf32, #tpu.memory_space<vmem>>, %arg6: memref<64x1xf32, #tpu.memory_space<vmem>>, %arg7: memref<64x512xf32, #tpu.memory_space<vmem>>, %arg8: memref<64x128xf32, #tpu.memory_space<vmem>>) attributes {dimension_semantics = [], scalar_prefetch = 0 : i64, scratch_operands = 2 : i64, tpu.core_type = #tpu.core_type<tc>} {
    %c0 = arith.constant 0 : index
    %c0_0 = arith.constant 0 : index
    %0 = vector.load %arg0[%c0, %c0_0] : memref<64x6xf32, #tpu.memory_space<vmem>>, vector<64x6xf32>
    %c0_1 = arith.constant 0 : index
    %c0_2 = arith.constant 0 : index
    %1 = vector.load %arg1[%c0_1, %c0_2] : memref<6x512xf32, #tpu.memory_space<vmem>>, vector<6x512xf32>
    %cst = arith.constant dense<0.000000e+00> : vector<64x512xf32>
    %2 = tpu.matmul %0, %1, %cst {dimension_numbers = #tpu.dot_dimension_numbers<[1], [0], [0], [1], [0, 0, 1, 1], [], []>} : vector<64x6xf32>, vector<6x512xf32>, vector<64x512xf32> -> vector<64x512xf32>
    %c0_3 = arith.constant 0 : index
    %c0_4 = arith.constant 0 : index
    %3 = vector.load %arg2[%c0_3, %c0_4] : memref<1x512xf32, #tpu.memory_space<vmem>>, vector<1x512xf32>
    %4 = vector.broadcast %3 : vector<1x512xf32> to vector<64x512xf32>
    %5 = arith.addf %2, %4 : vector<64x512xf32>
    %c0_5 = arith.constant 0 : index
    %c0_6 = arith.constant 0 : index
    %6 = vector.load %arg7[%c0_5, %c0_6] : memref<64x512xf32, #tpu.memory_space<vmem>>, vector<64x512xf32>
    tpu.vector_store %arg7[%c0_5, %c0_6], %5 {strides = array<i32>} : memref<64x512xf32, #tpu.memory_space<vmem>>, vector<64x512xf32>,
    %cst_7 = arith.constant 0.000000e+00 : f32
    %7 = vector.broadcast %cst_7 : f32 to vector<8x128xf32>
    %c0_i32 = arith.constant 0 : i32
    %c8_i32 = arith.constant 8 : i32
    %8 = arith.muli %c0_i32, %c8_i32 : i32
    %9 = tpu.assume_multiple %8, 8 : i32
    %10 = arith.index_cast %9 : i32 to index
    %c0_8 = arith.constant 0 : index
    %11 = vector.load %arg7[%10, %c0_8] : memref<64x512xf32, #tpu.memory_space<vmem>>, vector<8x512xf32>
    %12 = arith.truncf %7 : vector<8x128xf32> to vector<8x128xbf16>
    %c0_9 = arith.constant 0 : index
    %c0_10 = arith.constant 0 : index
    %13 = vector.load %arg3[%c0_9, %c0_10] : memref<128x512xbf16, #tpu.memory_space<vmem>>, vector<128x512xbf16>
    %cst_11 = arith.constant dense<0.000000e+00> : vector<8x512xf32>
    %14 = tpu.matmul %12, %13, %cst_11 {dimension_numbers = #tpu.dot_dimension_numbers<[1], [0], [0], [1], [0, 0, 1, 1], [], []>} : vector<8x128xbf16>, vector<128x512xbf16>, vector<8x512xf32> -> vector<8x512xf32>
    %15 = arith.addf %11, %14 : vector<8x512xf32>
    %16 = vector.extract_strided_slice %15 {offsets = [0, 0], sizes = [8, 128], strides = [1, 1]} : vector<8x512xf32> to vector<8x128xf32>
    %17 = arith.negf %16 : vector<8x128xf32>
    %18 = math.exp %17 : vector<8x128xf32>
    %cst_12 = arith.constant 1.000000e+00 : f32
    %19 = vector.broadcast %cst_12 : f32 to vector<8x128xf32>
    %20 = arith.addf %19, %18 : vector<8x128xf32>
    %21 = arith.divf %19, %20 : vector<8x128xf32>
    %22 = vector.extract_strided_slice %15 {offsets = [0, 128], sizes = [8, 128], strides = [1, 1]} : vector<8x512xf32> to vector<8x128xf32>
    %23 = arith.negf %22 : vector<8x128xf32>
    %24 = math.exp %23 : vector<8x128xf32>
    %cst_13 = arith.constant 1.000000e+00 : f32
    %25 = vector.broadcast %cst_13 : f32 to vector<8x128xf32>
    %26 = arith.addf %25, %24 : vector<8x128xf32>
    %27 = arith.divf %25, %26 : vector<8x128xf32>
    %28 = vector.extract_strided_slice %15 {offsets = [0, 256], sizes = [8, 128], strides = [1, 1]} : vector<8x512xf32> to vector<8x128xf32>
    %29 = math.tanh %28 : vector<8x128xf32>
    %30 = vector.extract_strided_slice %15 {offsets = [0, 384], sizes = [8, 128], strides = [1, 1]} : vector<8x512xf32> to vector<8x128xf32>
    %31 = arith.negf %30 : vector<8x128xf32>
    %32 = math.exp %31 : vector<8x128xf32>
    %cst_14 = arith.constant 1.000000e+00 : f32
    %33 = vector.broadcast %cst_14 : f32 to vector<8x128xf32>
    %34 = arith.addf %33, %32 : vector<8x128xf32>
    %35 = arith.divf %33, %34 : vector<8x128xf32>
    %36 = arith.mulf %27, %7 : vector<8x128xf32>
    %37 = arith.mulf %21, %29 : vector<8x128xf32>
    %38 = arith.addf %36, %37 : vector<8x128xf32>
    %39 = math.tanh %38 : vector<8x128xf32>
    %40 = arith.mulf %35, %39 : vector<8x128xf32>
    %41 = arith.index_cast %9 : i32 to index
    %c0_15 = arith.constant 0 : index
    %42 = vector.load %arg8[%41, %c0_15] : memref<64x128xf32, #tpu.memory_space<vmem>>, vector<8x128xf32>
    tpu.vector_store %arg8[%41, %c0_15], %40 {strides = array<i32>} : memref<64x128xf32, #tpu.memory_space<vmem>>, vector<8x128xf32>,
    %c1_i32 = arith.constant 1 : i32
    %c8_i32_16 = arith.constant 8 : i32
    %43 = arith.muli %c1_i32, %c8_i32_16 : i32
    %44 = tpu.assume_multiple %43, 8 : i32
    %45 = arith.index_cast %44 : i32 to index
    %c0_17 = arith.constant 0 : index
    %46 = vector.load %arg7[%45, %c0_17] : memref<64x512xf32, #tpu.memory_space<vmem>>, vector<8x512xf32>
    %47 = arith.truncf %40 : vector<8x128xf32> to vector<8x128xbf16>
    %c0_18 = arith.constant 0 : index
    %c0_19 = arith.constant 0 : index
    %48 = vector.load %arg3[%c0_18, %c0_19] : memref<128x512xbf16, #tpu.memory_space<vmem>>, vector<128x512xbf16>
    %cst_20 = arith.constant dense<0.000000e+00> : vector<8x512xf32>
    %49 = tpu.matmul %47, %48, %cst_20 {dimension_numbers = #tpu.dot_dimension_numbers<[1], [0], [0], [1], [0, 0, 1, 1], [], []>} : vector<8x128xbf16>, vector<128x512xbf16>, vector<8x512xf32> -> vector<8x512xf32>
    %50 = arith.addf %46, %49 : vector<8x512xf32>
    %51 = vector.extract_strided_slice %50 {offsets = [0, 0], sizes = [8, 128], strides = [1, 1]} : vector<8x512xf32> to vector<8x128xf32>
    %52 = arith.negf %51 : vector<8x128xf32>
    %53 = math.exp %52 : vector<8x128xf32>
    %cst_21 = arith.constant 1.000000e+00 : f32
    %54 = vector.broadcast %cst_21 : f32 to vector<8x128xf32>
    %55 = arith.addf %54, %53 : vector<8x128xf32>
    %56 = arith.divf %54, %55 : vector<8x128xf32>
    %57 = vector.extract_strided_slice %50 {offsets = [0, 128], sizes = [8, 128], strides = [1, 1]} : vector<8x512xf32> to vector<8x128xf32>
    %58 = arith.negf %57 : vector<8x128xf32>
    %59 = math.exp %58 : vector<8x128xf32>
    %cst_22 = arith.constant 1.000000e+00 : f32
    %60 = vector.broadcast %cst_22 : f32 to vector<8x128xf32>
    %61 = arith.addf %60, %59 : vector<8x128xf32>
    %62 = arith.divf %60, %61 : vector<8x128xf32>
    %63 = vector.extract_strided_slice %50 {offsets = [0, 256], sizes = [8, 128], strides = [1, 1]} : vector<8x512xf32> to vector<8x128xf32>
    %64 = math.tanh %63 : vector<8x128xf32>
    %65 = vector.extract_strided_slice %50 {offsets = [0, 384], sizes = [8, 128], strides = [1, 1]} : vector<8x512xf32> to vector<8x128xf32>
    %66 = arith.negf %65 : vector<8x128xf32>
    %67 = math.exp %66 : vector<8x128xf32>
    %cst_23 = arith.constant 1.000000e+00 : f32
    %68 = vector.broadcast %cst_23 : f32 to vector<8x128xf32>
    %69 = arith.addf %68, %67 : vector<8x128xf32>
    %70 = arith.divf %68, %69 : vector<8x128xf32>
    %71 = arith.mulf %62, %38 : vector<8x128xf32>
    %72 = arith.mulf %56, %64 : vector<8x128xf32>
    %73 = arith.addf %71, %72 : vector<8x128xf32>
    %74 = math.tanh %73 : vector<8x128xf32>
    %75 = arith.mulf %70, %74 : vector<8x128xf32>
    %76 = arith.index_cast %44 : i32 to index
    %c0_24 = arith.constant 0 : index
    %77 = vector.load %arg8[%76, %c0_24] : memref<64x128xf32, #tpu.memory_space<vmem>>, vector<8x128xf32>
    tpu.vector_store %arg8[%76, %c0_24], %75 {strides = array<i32>} : memref<64x128xf32, #tpu.memory_space<vmem>>, vector<8x128xf32>,
    %c2_i32 = arith.constant 2 : i32
    %c8_i32_25 = arith.constant 8 : i32
    %78 = arith.muli %c2_i32, %c8_i32_25 : i32
    %79 = tpu.assume_multiple %78, 8 : i32
    %80 = arith.index_cast %79 : i32 to index
    %c0_26 = arith.constant 0 : index
    %81 = vector.load %arg7[%80, %c0_26] : memref<64x512xf32, #tpu.memory_space<vmem>>, vector<8x512xf32>
    %82 = arith.truncf %75 : vector<8x128xf32> to vector<8x128xbf16>
    %c0_27 = arith.constant 0 : index
    %c0_28 = arith.constant 0 : index
    %83 = vector.load %arg3[%c0_27, %c0_28] : memref<128x512xbf16, #tpu.memory_space<vmem>>, vector<128x512xbf16>
    %cst_29 = arith.constant dense<0.000000e+00> : vector<8x512xf32>
    %84 = tpu.matmul %82, %83, %cst_29 {dimension_numbers = #tpu.dot_dimension_numbers<[1], [0], [0], [1], [0, 0, 1, 1], [], []>} : vector<8x128xbf16>, vector<128x512xbf16>, vector<8x512xf32> -> vector<8x512xf32>
    %85 = arith.addf %81, %84 : vector<8x512xf32>
    %86 = vector.extract_strided_slice %85 {offsets = [0, 0], sizes = [8, 128], strides = [1, 1]} : vector<8x512xf32> to vector<8x128xf32>
    %87 = arith.negf %86 : vector<8x128xf32>
    %88 = math.exp %87 : vector<8x128xf32>
    %cst_30 = arith.constant 1.000000e+00 : f32
    %89 = vector.broadcast %cst_30 : f32 to vector<8x128xf32>
    %90 = arith.addf %89, %88 : vector<8x128xf32>
    %91 = arith.divf %89, %90 : vector<8x128xf32>
    %92 = vector.extract_strided_slice %85 {offsets = [0, 128], sizes = [8, 128], strides = [1, 1]} : vector<8x512xf32> to vector<8x128xf32>
    %93 = arith.negf %92 : vector<8x128xf32>
    %94 = math.exp %93 : vector<8x128xf32>
    %cst_31 = arith.constant 1.000000e+00 : f32
    %95 = vector.broadcast %cst_31 : f32 to vector<8x128xf32>
    %96 = arith.addf %95, %94 : vector<8x128xf32>
    %97 = arith.divf %95, %96 : vector<8x128xf32>
    %98 = vector.extract_strided_slice %85 {offsets = [0, 256], sizes = [8, 128], strides = [1, 1]} : vector<8x512xf32> to vector<8x128xf32>
    %99 = math.tanh %98 : vector<8x128xf32>
    %100 = vector.extract_strided_slice %85 {offsets = [0, 384], sizes = [8, 128], strides = [1, 1]} : vector<8x512xf32> to vector<8x128xf32>
    %101 = arith.negf %100 : vector<8x128xf32>
    %102 = math.exp %101 : vector<8x128xf32>
    %cst_32 = arith.constant 1.000000e+00 : f32
    %103 = vector.broadcast %cst_32 : f32 to vector<8x128xf32>
    %104 = arith.addf %103, %102 : vector<8x128xf32>
    %105 = arith.divf %103, %104 : vector<8x128xf32>
    %106 = arith.mulf %97, %73 : vector<8x128xf32>
    %107 = arith.mulf %91, %99 : vector<8x128xf32>
    %108 = arith.addf %106, %107 : vector<8x128xf32>
    %109 = math.tanh %108 : vector<8x128xf32>
    %110 = arith.mulf %105, %109 : vector<8x128xf32>
    %111 = arith.index_cast %79 : i32 to index
    %c0_33 = arith.constant 0 : index
    %112 = vector.load %arg8[%111, %c0_33] : memref<64x128xf32, #tpu.memory_space<vmem>>, vector<8x128xf32>
    tpu.vector_store %arg8[%111, %c0_33], %110 {strides = array<i32>} : memref<64x128xf32, #tpu.memory_space<vmem>>, vector<8x128xf32>,
    %c3_i32 = arith.constant 3 : i32
    %c8_i32_34 = arith.constant 8 : i32
    %113 = arith.muli %c3_i32, %c8_i32_34 : i32
    %114 = tpu.assume_multiple %113, 8 : i32
    %115 = arith.index_cast %114 : i32 to index
    %c0_35 = arith.constant 0 : index
    %116 = vector.load %arg7[%115, %c0_35] : memref<64x512xf32, #tpu.memory_space<vmem>>, vector<8x512xf32>
    %117 = arith.truncf %110 : vector<8x128xf32> to vector<8x128xbf16>
    %c0_36 = arith.constant 0 : index
    %c0_37 = arith.constant 0 : index
    %118 = vector.load %arg3[%c0_36, %c0_37] : memref<128x512xbf16, #tpu.memory_space<vmem>>, vector<128x512xbf16>
    %cst_38 = arith.constant dense<0.000000e+00> : vector<8x512xf32>
    %119 = tpu.matmul %117, %118, %cst_38 {dimension_numbers = #tpu.dot_dimension_numbers<[1], [0], [0], [1], [0, 0, 1, 1], [], []>} : vector<8x128xbf16>, vector<128x512xbf16>, vector<8x512xf32> -> vector<8x512xf32>
    %120 = arith.addf %116, %119 : vector<8x512xf32>
    %121 = vector.extract_strided_slice %120 {offsets = [0, 0], sizes = [8, 128], strides = [1, 1]} : vector<8x512xf32> to vector<8x128xf32>
    %122 = arith.negf %121 : vector<8x128xf32>
    %123 = math.exp %122 : vector<8x128xf32>
    %cst_39 = arith.constant 1.000000e+00 : f32
    %124 = vector.broadcast %cst_39 : f32 to vector<8x128xf32>
    %125 = arith.addf %124, %123 : vector<8x128xf32>
    %126 = arith.divf %124, %125 : vector<8x128xf32>
    %127 = vector.extract_strided_slice %120 {offsets = [0, 128], sizes = [8, 128], strides = [1, 1]} : vector<8x512xf32> to vector<8x128xf32>
    %128 = arith.negf %127 : vector<8x128xf32>
    %129 = math.exp %128 : vector<8x128xf32>
    %cst_40 = arith.constant 1.000000e+00 : f32
    %130 = vector.broadcast %cst_40 : f32 to vector<8x128xf32>
    %131 = arith.addf %130, %129 : vector<8x128xf32>
    %132 = arith.divf %130, %131 : vector<8x128xf32>
    %133 = vector.extract_strided_slice %120 {offsets = [0, 256], sizes = [8, 128], strides = [1, 1]} : vector<8x512xf32> to vector<8x128xf32>
    %134 = math.tanh %133 : vector<8x128xf32>
    %135 = vector.extract_strided_slice %120 {offsets = [0, 384], sizes = [8, 128], strides = [1, 1]} : vector<8x512xf32> to vector<8x128xf32>
    %136 = arith.negf %135 : vector<8x128xf32>
    %137 = math.exp %136 : vector<8x128xf32>
    %cst_41 = arith.constant 1.000000e+00 : f32
    %138 = vector.broadcast %cst_41 : f32 to vector<8x128xf32>
    %139 = arith.addf %138, %137 : vector<8x128xf32>
    %140 = arith.divf %138, %139 : vector<8x128xf32>
    %141 = arith.mulf %132, %108 : vector<8x128xf32>
    %142 = arith.mulf %126, %134 : vector<8x128xf32>
    %143 = arith.addf %141, %142 : vector<8x128xf32>
    %144 = math.tanh %143 : vector<8x128xf32>
    %145 = arith.mulf %140, %144 : vector<8x128xf32>
    %146 = arith.index_cast %114 : i32 to index
    %c0_42 = arith.constant 0 : index
    %147 = vector.load %arg8[%146, %c0_42] : memref<64x128xf32, #tpu.memory_space<vmem>>, vector<8x128xf32>
    tpu.vector_store %arg8[%146, %c0_42], %145 {strides = array<i32>} : memref<64x128xf32, #tpu.memory_space<vmem>>, vector<8x128xf32>,
    %c4_i32 = arith.constant 4 : i32
    %c8_i32_43 = arith.constant 8 : i32
    %148 = arith.muli %c4_i32, %c8_i32_43 : i32
    %149 = tpu.assume_multiple %148, 8 : i32
    %150 = arith.index_cast %149 : i32 to index
    %c0_44 = arith.constant 0 : index
    %151 = vector.load %arg7[%150, %c0_44] : memref<64x512xf32, #tpu.memory_space<vmem>>, vector<8x512xf32>
    %152 = arith.truncf %145 : vector<8x128xf32> to vector<8x128xbf16>
    %c0_45 = arith.constant 0 : index
    %c0_46 = arith.constant 0 : index
    %153 = vector.load %arg3[%c0_45, %c0_46] : memref<128x512xbf16, #tpu.memory_space<vmem>>, vector<128x512xbf16>
    %cst_47 = arith.constant dense<0.000000e+00> : vector<8x512xf32>
    %154 = tpu.matmul %152, %153, %cst_47 {dimension_numbers = #tpu.dot_dimension_numbers<[1], [0], [0], [1], [0, 0, 1, 1], [], []>} : vector<8x128xbf16>, vector<128x512xbf16>, vector<8x512xf32> -> vector<8x512xf32>
    %155 = arith.addf %151, %154 : vector<8x512xf32>
    %156 = vector.extract_strided_slice %155 {offsets = [0, 0], sizes = [8, 128], strides = [1, 1]} : vector<8x512xf32> to vector<8x128xf32>
    %157 = arith.negf %156 : vector<8x128xf32>
    %158 = math.exp %157 : vector<8x128xf32>
    %cst_48 = arith.constant 1.000000e+00 : f32
    %159 = vector.broadcast %cst_48 : f32 to vector<8x128xf32>
    %160 = arith.addf %159, %158 : vector<8x128xf32>
    %161 = arith.divf %159, %160 : vector<8x128xf32>
    %162 = vector.extract_strided_slice %155 {offsets = [0, 128], sizes = [8, 128], strides = [1, 1]} : vector<8x512xf32> to vector<8x128xf32>
    %163 = arith.negf %162 : vector<8x128xf32>
    %164 = math.exp %163 : vector<8x128xf32>
    %cst_49 = arith.constant 1.000000e+00 : f32
    %165 = vector.broadcast %cst_49 : f32 to vector<8x128xf32>
    %166 = arith.addf %165, %164 : vector<8x128xf32>
    %167 = arith.divf %165, %166 : vector<8x128xf32>
    %168 = vector.extract_strided_slice %155 {offsets = [0, 256], sizes = [8, 128], strides = [1, 1]} : vector<8x512xf32> to vector<8x128xf32>
    %169 = math.tanh %168 : vector<8x128xf32>
    %170 = vector.extract_strided_slice %155 {offsets = [0, 384], sizes = [8, 128], strides = [1, 1]} : vector<8x512xf32> to vector<8x128xf32>
    %171 = arith.negf %170 : vector<8x128xf32>
    %172 = math.exp %171 : vector<8x128xf32>
    %cst_50 = arith.constant 1.000000e+00 : f32
    %173 = vector.broadcast %cst_50 : f32 to vector<8x128xf32>
    %174 = arith.addf %173, %172 : vector<8x128xf32>
    %175 = arith.divf %173, %174 : vector<8x128xf32>
    %176 = arith.mulf %167, %143 : vector<8x128xf32>
    %177 = arith.mulf %161, %169 : vector<8x128xf32>
    %178 = arith.addf %176, %177 : vector<8x128xf32>
    %179 = math.tanh %178 : vector<8x128xf32>
    %180 = arith.mulf %175, %179 : vector<8x128xf32>
    %181 = arith.index_cast %149 : i32 to index
    %c0_51 = arith.constant 0 : index
    %182 = vector.load %arg8[%181, %c0_51] : memref<64x128xf32, #tpu.memory_space<vmem>>, vector<8x128xf32>
    tpu.vector_store %arg8[%181, %c0_51], %180 {strides = array<i32>} : memref<64x128xf32, #tpu.memory_space<vmem>>, vector<8x128xf32>,
    %c5_i32 = arith.constant 5 : i32
    %c8_i32_52 = arith.constant 8 : i32
    %183 = arith.muli %c5_i32, %c8_i32_52 : i32
    %184 = tpu.assume_multiple %183, 8 : i32
    %185 = arith.index_cast %184 : i32 to index
    %c0_53 = arith.constant 0 : index
    %186 = vector.load %arg7[%185, %c0_53] : memref<64x512xf32, #tpu.memory_space<vmem>>, vector<8x512xf32>
    %187 = arith.truncf %180 : vector<8x128xf32> to vector<8x128xbf16>
    %c0_54 = arith.constant 0 : index
    %c0_55 = arith.constant 0 : index
    %188 = vector.load %arg3[%c0_54, %c0_55] : memref<128x512xbf16, #tpu.memory_space<vmem>>, vector<128x512xbf16>
    %cst_56 = arith.constant dense<0.000000e+00> : vector<8x512xf32>
    %189 = tpu.matmul %187, %188, %cst_56 {dimension_numbers = #tpu.dot_dimension_numbers<[1], [0], [0], [1], [0, 0, 1, 1], [], []>} : vector<8x128xbf16>, vector<128x512xbf16>, vector<8x512xf32> -> vector<8x512xf32>
    %190 = arith.addf %186, %189 : vector<8x512xf32>
    %191 = vector.extract_strided_slice %190 {offsets = [0, 0], sizes = [8, 128], strides = [1, 1]} : vector<8x512xf32> to vector<8x128xf32>
    %192 = arith.negf %191 : vector<8x128xf32>
    %193 = math.exp %192 : vector<8x128xf32>
    %cst_57 = arith.constant 1.000000e+00 : f32
    %194 = vector.broadcast %cst_57 : f32 to vector<8x128xf32>
    %195 = arith.addf %194, %193 : vector<8x128xf32>
    %196 = arith.divf %194, %195 : vector<8x128xf32>
    %197 = vector.extract_strided_slice %190 {offsets = [0, 128], sizes = [8, 128], strides = [1, 1]} : vector<8x512xf32> to vector<8x128xf32>
    %198 = arith.negf %197 : vector<8x128xf32>
    %199 = math.exp %198 : vector<8x128xf32>
    %cst_58 = arith.constant 1.000000e+00 : f32
    %200 = vector.broadcast %cst_58 : f32 to vector<8x128xf32>
    %201 = arith.addf %200, %199 : vector<8x128xf32>
    %202 = arith.divf %200, %201 : vector<8x128xf32>
    %203 = vector.extract_strided_slice %190 {offsets = [0, 256], sizes = [8, 128], strides = [1, 1]} : vector<8x512xf32> to vector<8x128xf32>
    %204 = math.tanh %203 : vector<8x128xf32>
    %205 = vector.extract_strided_slice %190 {offsets = [0, 384], sizes = [8, 128], strides = [1, 1]} : vector<8x512xf32> to vector<8x128xf32>
    %206 = arith.negf %205 : vector<8x128xf32>
    %207 = math.exp %206 : vector<8x128xf32>
    %cst_59 = arith.constant 1.000000e+00 : f32
    %208 = vector.broadcast %cst_59 : f32 to vector<8x128xf32>
    %209 = arith.addf %208, %207 : vector<8x128xf32>
    %210 = arith.divf %208, %209 : vector<8x128xf32>
    %211 = arith.mulf %202, %178 : vector<8x128xf32>
    %212 = arith.mulf %196, %204 : vector<8x128xf32>
    %213 = arith.addf %211, %212 : vector<8x128xf32>
    %214 = math.tanh %213 : vector<8x128xf32>
    %215 = arith.mulf %210, %214 : vector<8x128xf32>
    %216 = arith.index_cast %184 : i32 to index
    %c0_60 = arith.constant 0 : index
    %217 = vector.load %arg8[%216, %c0_60] : memref<64x128xf32, #tpu.memory_space<vmem>>, vector<8x128xf32>
    tpu.vector_store %arg8[%216, %c0_60], %215 {strides = array<i32>} : memref<64x128xf32, #tpu.memory_space<vmem>>, vector<8x128xf32>,
    %c6_i32 = arith.constant 6 : i32
    %c8_i32_61 = arith.constant 8 : i32
    %218 = arith.muli %c6_i32, %c8_i32_61 : i32
    %219 = tpu.assume_multiple %218, 8 : i32
    %220 = arith.index_cast %219 : i32 to index
    %c0_62 = arith.constant 0 : index
    %221 = vector.load %arg7[%220, %c0_62] : memref<64x512xf32, #tpu.memory_space<vmem>>, vector<8x512xf32>
    %222 = arith.truncf %215 : vector<8x128xf32> to vector<8x128xbf16>
    %c0_63 = arith.constant 0 : index
    %c0_64 = arith.constant 0 : index
    %223 = vector.load %arg3[%c0_63, %c0_64] : memref<128x512xbf16, #tpu.memory_space<vmem>>, vector<128x512xbf16>
    %cst_65 = arith.constant dense<0.000000e+00> : vector<8x512xf32>
    %224 = tpu.matmul %222, %223, %cst_65 {dimension_numbers = #tpu.dot_dimension_numbers<[1], [0], [0], [1], [0, 0, 1, 1], [], []>} : vector<8x128xbf16>, vector<128x512xbf16>, vector<8x512xf32> -> vector<8x512xf32>
    %225 = arith.addf %221, %224 : vector<8x512xf32>
    %226 = vector.extract_strided_slice %225 {offsets = [0, 0], sizes = [8, 128], strides = [1, 1]} : vector<8x512xf32> to vector<8x128xf32>
    %227 = arith.negf %226 : vector<8x128xf32>
    %228 = math.exp %227 : vector<8x128xf32>
    %cst_66 = arith.constant 1.000000e+00 : f32
    %229 = vector.broadcast %cst_66 : f32 to vector<8x128xf32>
    %230 = arith.addf %229, %228 : vector<8x128xf32>
    %231 = arith.divf %229, %230 : vector<8x128xf32>
    %232 = vector.extract_strided_slice %225 {offsets = [0, 128], sizes = [8, 128], strides = [1, 1]} : vector<8x512xf32> to vector<8x128xf32>
    %233 = arith.negf %232 : vector<8x128xf32>
    %234 = math.exp %233 : vector<8x128xf32>
    %cst_67 = arith.constant 1.000000e+00 : f32
    %235 = vector.broadcast %cst_67 : f32 to vector<8x128xf32>
    %236 = arith.addf %235, %234 : vector<8x128xf32>
    %237 = arith.divf %235, %236 : vector<8x128xf32>
    %238 = vector.extract_strided_slice %225 {offsets = [0, 256], sizes = [8, 128], strides = [1, 1]} : vector<8x512xf32> to vector<8x128xf32>
    %239 = math.tanh %238 : vector<8x128xf32>
    %240 = vector.extract_strided_slice %225 {offsets = [0, 384], sizes = [8, 128], strides = [1, 1]} : vector<8x512xf32> to vector<8x128xf32>
    %241 = arith.negf %240 : vector<8x128xf32>
    %242 = math.exp %241 : vector<8x128xf32>
    %cst_68 = arith.constant 1.000000e+00 : f32
    %243 = vector.broadcast %cst_68 : f32 to vector<8x128xf32>
    %244 = arith.addf %243, %242 : vector<8x128xf32>
    %245 = arith.divf %243, %244 : vector<8x128xf32>
    %246 = arith.mulf %237, %213 : vector<8x128xf32>
    %247 = arith.mulf %231, %239 : vector<8x128xf32>
    %248 = arith.addf %246, %247 : vector<8x128xf32>
    %249 = math.tanh %248 : vector<8x128xf32>
    %250 = arith.mulf %245, %249 : vector<8x128xf32>
    %251 = arith.index_cast %219 : i32 to index
    %c0_69 = arith.constant 0 : index
    %252 = vector.load %arg8[%251, %c0_69] : memref<64x128xf32, #tpu.memory_space<vmem>>, vector<8x128xf32>
    tpu.vector_store %arg8[%251, %c0_69], %250 {strides = array<i32>} : memref<64x128xf32, #tpu.memory_space<vmem>>, vector<8x128xf32>,
    %c7_i32 = arith.constant 7 : i32
    %c8_i32_70 = arith.constant 8 : i32
    %253 = arith.muli %c7_i32, %c8_i32_70 : i32
    %254 = tpu.assume_multiple %253, 8 : i32
    %255 = arith.index_cast %254 : i32 to index
    %c0_71 = arith.constant 0 : index
    %256 = vector.load %arg7[%255, %c0_71] : memref<64x512xf32, #tpu.memory_space<vmem>>, vector<8x512xf32>
    %257 = arith.truncf %250 : vector<8x128xf32> to vector<8x128xbf16>
    %c0_72 = arith.constant 0 : index
    %c0_73 = arith.constant 0 : index
    %258 = vector.load %arg3[%c0_72, %c0_73] : memref<128x512xbf16, #tpu.memory_space<vmem>>, vector<128x512xbf16>
    %cst_74 = arith.constant dense<0.000000e+00> : vector<8x512xf32>
    %259 = tpu.matmul %257, %258, %cst_74 {dimension_numbers = #tpu.dot_dimension_numbers<[1], [0], [0], [1], [0, 0, 1, 1], [], []>} : vector<8x128xbf16>, vector<128x512xbf16>, vector<8x512xf32> -> vector<8x512xf32>
    %260 = arith.addf %256, %259 : vector<8x512xf32>
    %261 = vector.extract_strided_slice %260 {offsets = [0, 0], sizes = [8, 128], strides = [1, 1]} : vector<8x512xf32> to vector<8x128xf32>
    %262 = arith.negf %261 : vector<8x128xf32>
    %263 = math.exp %262 : vector<8x128xf32>
    %cst_75 = arith.constant 1.000000e+00 : f32
    %264 = vector.broadcast %cst_75 : f32 to vector<8x128xf32>
    %265 = arith.addf %264, %263 : vector<8x128xf32>
    %266 = arith.divf %264, %265 : vector<8x128xf32>
    %267 = vector.extract_strided_slice %260 {offsets = [0, 128], sizes = [8, 128], strides = [1, 1]} : vector<8x512xf32> to vector<8x128xf32>
    %268 = arith.negf %267 : vector<8x128xf32>
    %269 = math.exp %268 : vector<8x128xf32>
    %cst_76 = arith.constant 1.000000e+00 : f32
    %270 = vector.broadcast %cst_76 : f32 to vector<8x128xf32>
    %271 = arith.addf %270, %269 : vector<8x128xf32>
    %272 = arith.divf %270, %271 : vector<8x128xf32>
    %273 = vector.extract_strided_slice %260 {offsets = [0, 256], sizes = [8, 128], strides = [1, 1]} : vector<8x512xf32> to vector<8x128xf32>
    %274 = math.tanh %273 : vector<8x128xf32>
    %275 = vector.extract_strided_slice %260 {offsets = [0, 384], sizes = [8, 128], strides = [1, 1]} : vector<8x512xf32> to vector<8x128xf32>
    %276 = arith.negf %275 : vector<8x128xf32>
    %277 = math.exp %276 : vector<8x128xf32>
    %cst_77 = arith.constant 1.000000e+00 : f32
    %278 = vector.broadcast %cst_77 : f32 to vector<8x128xf32>
    %279 = arith.addf %278, %277 : vector<8x128xf32>
    %280 = arith.divf %278, %279 : vector<8x128xf32>
    %281 = arith.mulf %272, %248 : vector<8x128xf32>
    %282 = arith.mulf %266, %274 : vector<8x128xf32>
    %283 = arith.addf %281, %282 : vector<8x128xf32>
    %284 = math.tanh %283 : vector<8x128xf32>
    %285 = arith.mulf %280, %284 : vector<8x128xf32>
    %286 = arith.index_cast %254 : i32 to index
    %c0_78 = arith.constant 0 : index
    %287 = vector.load %arg8[%286, %c0_78] : memref<64x128xf32, #tpu.memory_space<vmem>>, vector<8x128xf32>
    tpu.vector_store %arg8[%286, %c0_78], %285 {strides = array<i32>} : memref<64x128xf32, #tpu.memory_space<vmem>>, vector<8x128xf32>,
    %c8_i32_79 = arith.constant 8 : i32
    %c0_80 = arith.constant 0 : index
    %c0_81 = arith.constant 0 : index
    %288 = vector.load %arg8[%c0_80, %c0_81] : memref<64x128xf32, #tpu.memory_space<vmem>>, vector<64x128xf32>
    %c0_82 = arith.constant 0 : index
    %c0_83 = arith.constant 0 : index
    %289 = vector.load %arg4[%c0_82, %c0_83] : memref<128x1xf32, #tpu.memory_space<vmem>>, vector<128x1xf32>
    %cst_84 = arith.constant dense<0.000000e+00> : vector<64x1xf32>
    %290 = tpu.matmul %288, %289, %cst_84 {dimension_numbers = #tpu.dot_dimension_numbers<[1], [0], [0], [1], [0, 0, 1, 1], [], []>} : vector<64x128xf32>, vector<128x1xf32>, vector<64x1xf32> -> vector<64x1xf32>
    %c0_85 = arith.constant 0 : index
    %c0_86 = arith.constant 0 : index
    %291 = vector.load %arg5[%c0_85, %c0_86] : memref<1x1xf32, #tpu.memory_space<vmem>>, vector<1x1xf32>
    %292 = vector.broadcast %291 : vector<1x1xf32> to vector<64x1xf32>
    %293 = arith.addf %290, %292 : vector<64x1xf32>
    %c0_87 = arith.constant 0 : index
    %c0_88 = arith.constant 0 : index
    %294 = vector.load %arg6[%c0_87, %c0_88] : memref<64x1xf32, #tpu.memory_space<vmem>>, vector<64x1xf32>
    tpu.vector_store %arg6[%c0_87, %c0_88], %293 {strides = array<i32>} : memref<64x1xf32, #tpu.memory_space<vmem>>, vector<64x1xf32>,
    return
  }
}

</mosaic_0001>

<llo_original>
// kernel: weld_lstm_forward.1
$region0: #{weld_lstm_forward.1}
  #allocation0 [shape = 'u32[]', space=smem, size = 0x4, offset = 0x4, fixed_abs, tag = 'smem constant byte address 0x4 - core index']
  #allocation1 [shape = 'u32[72,128]{1,0:T(1,128)}', space=vmem, size = 0x9000, scoped, tag = 'internal scratch']
  #allocation2 [shape = 'f32[64,512]{1,0:T(8,128)}', space=vmem, size = 0x20000, scoped, tag = 'scratch operand']
  #allocation3 [shape = 'f32[64,128]{1,0:T(8,128)}', space=vmem, size = 0x8000, scoped, tag = 'scratch operand']
  #allocation4 [shape = 'f32[1,1]{1,0:T(1,128)S(1)}', space=vmem, size = 0x200, scoped, tag = 'scoped memory for weld_lstm_forward.1']
  %s0 = inlined_call_operand.vmem [shape: f32[64,6], index: 0, kind: input, shape index: {}]
  %s1 = inlined_call_operand.vmem [shape: f32[6,512], index: 1, kind: input, shape index: {}]
  %s2 = inlined_call_operand.vmem [shape: f32[1,512], index: 2, kind: input, shape index: {}]
  %s3 = inlined_call_operand.vmem [shape: bf16[128,512], index: 3, kind: input, shape index: {}]
  %s4 = inlined_call_operand.vmem [shape: f32[128,1], index: 4, kind: input, shape index: {}]
  %s5 = inlined_call_operand.<no memory space> [shape: f32[1,1], index: 5, kind: input, shape index: {}]
  %s6 = inlined_call_operand.vmem [shape: f32[64,1], index: 6, kind: output, shape index: {}]
  %s7 = sld [smem:[#allocation0]]
  $region34: #{weld_lstm_forward.1} parent=0
    _
  %s9 = ssub.s32 1, %s7
  %s10 = scalar_select 0, %s9, %s7
  %v11 = vstv %s5
  %12 = vst [vmem:[#allocation4] sm:$0x1] %v11
  // Predicated region
  $region2: #{weld_lstm_forward.1} parent=0 // pred_check
    _
  $region3: #{weld_lstm_forward.1} parent=0 // pred_check_branch
    %14 = sbr.rel (0) target = $region5
  $region4: #{weld_lstm_forward.1} parent=0 // pred_region
    _
  $region5: #{weld_lstm_forward.1} parent=0 // pred_fallthru
    _
  // Predicated region
  $region6: #{weld_lstm_forward.1} parent=0 // pred_check
    _
  $region7: #{weld_lstm_forward.1} parent=0 // pred_check_branch
    %16 = sbr.rel (0) target = $region9
  $region8: #{weld_lstm_forward.1} parent=0 // pred_region
    _
  $region9: #{weld_lstm_forward.1} parent=0 // pred_fallthru
    _
  // Predicated region
  $region10: #{weld_lstm_forward.1} parent=0 // pred_check
    _
  $region11: #{weld_lstm_forward.1} parent=0 // pred_check_branch
    %18 = sbr.rel (0) target = $region13
  $region12: #{weld_lstm_forward.1} parent=0 // pred_region
    _
  $region13: #{weld_lstm_forward.1} parent=0 // pred_fallthru
    _
  // Predicated region
  $region14: #{weld_lstm_forward.1} parent=0 // pred_check
    _
  $region15: #{weld_lstm_forward.1} parent=0 // pred_check_branch
    %20 = sbr.rel (0) target = $region17
  $region16: #{weld_lstm_forward.1} parent=0 // pred_region
    _
  $region17: #{weld_lstm_forward.1} parent=0 // pred_fallthru
    _
  // Predicated region
  $region18: #{weld_lstm_forward.1} parent=0 // pred_check
    _
  $region19: #{weld_lstm_forward.1} parent=0 // pred_check_branch
    %22 = sbr.rel (0) target = $region21
  $region20: #{weld_lstm_forward.1} parent=0 // pred_region
    _
  $region21: #{weld_lstm_forward.1} parent=0 // pred_fallthru
    _
  // Predicated region
  $region22: #{weld_lstm_forward.1} parent=0 // pred_check
    _
  $region23: #{weld_lstm_forward.1} parent=0 // pred_check_branch
    %24 = sbr.rel (0) target = $region25
  $region24: #{weld_lstm_forward.1} parent=0 // pred_region
    _
  $region25: #{weld_lstm_forward.1} parent=0 // pred_fallthru
    _
  %v26 = vld [vmem:[%s0] sm:$0xff]
  %v27 = vld [vmem:[%s0 + $0x8] sm:$0xff]
  %v28 = vld [vmem:[%s0 + $0x10] sm:$0xff]
  %v29 = vld [vmem:[%s0 + $0x18] sm:$0xff]
  %v30 = vld [vmem:[%s0 + $0x20] sm:$0xff]
  %v31 = vld [vmem:[%s0 + $0x28] sm:$0xff]
  %v32 = vld [vmem:[%s0 + $0x30] sm:$0xff]
  %v33 = vld [vmem:[%s0 + $0x38] sm:$0xff]
  %v34 = vld [vmem:[%s1] sm:$0x3f]
  %v35 = vld [vmem:[%s1 + $0x8] sm:$0x3f]
  %v36 = vld [vmem:[%s1 + $0x10] sm:$0x3f]
  %v37 = vld [vmem:[%s1 + $0x18] sm:$0x3f]
  %v38 = vld [vmem:[%s2] sm:$0xf]
  %v40 = vperm.slane %v38, 0
  %v41 = vperm.slane %v38, 1
  %v42 = vperm.slane %v38, 2
  %v43 = vperm.slane %v38, 3
  %vm48 = vcmask 48128
  %v50 = vsel %vm48, %v26, 0
  %v53 = vsel %vm48, %v27, 0
  %v56 = vsel %vm48, %v28, 0
  %v59 = vsel %vm48, %v29, 0
  %v62 = vsel %vm48, %v30, 0
  %v65 = vsel %vm48, %v31, 0
  %v68 = vsel %vm48, %v32, 0
  %v71 = vsel %vm48, %v33, 0
  %vm73 = vcmask 1045504
  %v75 = vsel %vm73, %v34, 0
  %v78 = vsel %vm73, %v35, 0
  %v81 = vsel %vm73, %v36, 0
  %v84 = vsel %vm73, %v37, 0
  %86 = vmatpush.msra.mxu0 0.0
  %87 = vmatpush.msra.mxu0 0.0
  %88 = vmatpush.msra.mxu0 0.0
  %89 = vmatpush.msra.mxu0 0.0
  %90 = vmatpush.msra.mxu0 0.0
  %91 = vmatpush.msra.mxu0 0.0
  %92 = vmatpush.msra.mxu0 0.0
  %93 = vmatpush.msra.mxu0 0.0
  %94 = vmatpush.msra.mxu0 0.0
  %95 = vmatpush.msra.mxu0 0.0
  %96 = vmatpush.msra.mxu0 0.0
  %97 = vmatpush.msra.mxu0 0.0
  %98 = vmatpush.msra.mxu0 0.0
  %99 = vmatpush.msra.mxu0 0.0
  %100 = vmatpush.msra.mxu0 0.0
  %101 = vmatpush.msra.mxu0 %v75
  %102 = vmatmul.f32.gmra.mxu0 %v50
  %v103 = vpop.f32.mrf.mxu0
  %v104 = vadd.f32 %v40, %v103
  %105 = vmatmul.f32.gmra.mxu0 %v53
  %v106 = vpop.f32.mrf.mxu0
  %v107 = vadd.f32 %v40, %v106
  %108 = vmatmul.f32.gmra.mxu0 %v56
  %v109 = vpop.f32.mrf.mxu0
  %v110 = vadd.f32 %v40, %v109
  %111 = vmatmul.f32.gmra.mxu0 %v59
  %v112 = vpop.f32.mrf.mxu0
  %v113 = vadd.f32 %v40, %v112
  %114 = vmatmul.f32.gmra.mxu0 %v62
  %v115 = vpop.f32.mrf.mxu0
  %v116 = vadd.f32 %v40, %v115
  %117 = vmatmul.f32.gmra.mxu0 %v65
  %v118 = vpop.f32.mrf.mxu0
  %v119 = vadd.f32 %v40, %v118
  %120 = vmatmul.f32.gmra.mxu0 %v68
  %v121 = vpop.f32.mrf.mxu0
  %v122 = vadd.f32 %v40, %v121
  %123 = vmatmul.f32.gmra.mxu0 %v71
  %v124 = vpop.f32.mrf.mxu0
  %v125 = vadd.f32 %v40, %v124
  %126 = vdwg.mxu0
  %127 = vmatpush.msra.mxu0 0.0
  %128 = vmatpush.msra.mxu0 0.0
  %129 = vmatpush.msra.mxu0 0.0
  %130 = vmatpush.msra.mxu0 0.0
  %131 = vmatpush.msra.mxu0 0.0
  %132 = vmatpush.msra.mxu0 0.0
  %133 = vmatpush.msra.mxu0 0.0
  %134 = vmatpush.msra.mxu0 0.0
  %135 = vmatpush.msra.mxu0 0.0
  %136 = vmatpush.msra.mxu0 0.0
  %137 = vmatpush.msra.mxu0 0.0
  %138 = vmatpush.msra.mxu0 0.0
  %139 = vmatpush.msra.mxu0 0.0
  %140 = vmatpush.msra.mxu0 0.0
  %141 = vmatpush.msra.mxu0 0.0
  %142 = vmatpush.msra.mxu0 %v78
  %143 = vmatmul.f32.gmra.mxu0 %v50
  %v144 = vpop.f32.mrf.mxu0
  %v145 = vadd.f32 %v41, %v144
  %146 = vmatmul.f32.gmra.mxu0 %v53
  %v147 = vpop.f32.mrf.mxu0
  %v148 = vadd.f32 %v41, %v147
  %149 = vmatmul.f32.gmra.mxu0 %v56
  %v150 = vpop.f32.mrf.mxu0
  %v151 = vadd.f32 %v41, %v150
  %152 = vmatmul.f32.gmra.mxu0 %v59
  %v153 = vpop.f32.mrf.mxu0
  %v154 = vadd.f32 %v41, %v153
  %155 = vmatmul.f32.gmra.mxu0 %v62
  %v156 = vpop.f32.mrf.mxu0
  %v157 = vadd.f32 %v41, %v156
  %158 = vmatmul.f32.gmra.mxu0 %v65
  %v159 = vpop.f32.mrf.mxu0
  %v160 = vadd.f32 %v41, %v159
  %161 = vmatmul.f32.gmra.mxu0 %v68
  %v162 = vpop.f32.mrf.mxu0
  %v163 = vadd.f32 %v41, %v162
  %164 = vmatmul.f32.gmra.mxu0 %v71
  %v165 = vpop.f32.mrf.mxu0
  %v166 = vadd.f32 %v41, %v165
  %167 = vdwg.mxu0
  %168 = vmatpush.msra.mxu0 0.0
  %169 = vmatpush.msra.mxu0 0.0
  %170 = vmatpush.msra.mxu0 0.0
  %171 = vmatpush.msra.mxu0 0.0
  %172 = vmatpush.msra.mxu0 0.0
  %173 = vmatpush.msra.mxu0 0.0
  %174 = vmatpush.msra.mxu0 0.0
  %175 = vmatpush.msra.mxu0 0.0
  %176 = vmatpush.msra.mxu0 0.0
  %177 = vmatpush.msra.mxu0 0.0
  %178 = vmatpush.msra.mxu0 0.0
  %179 = vmatpush.msra.mxu0 0.0
  %180 = vmatpush.msra.mxu0 0.0
  %181 = vmatpush.msra.mxu0 0.0
  %182 = vmatpush.msra.mxu0 0.0
  %183 = vmatpush.msra.mxu0 %v81
  %184 = vmatmul.f32.gmra.mxu0 %v50
  %v185 = vpop.f32.mrf.mxu0
  %v186 = vadd.f32 %v42, %v185
  %187 = vmatmul.f32.gmra.mxu0 %v53
  %v188 = vpop.f32.mrf.mxu0
  %v189 = vadd.f32 %v42, %v188
  %190 = vmatmul.f32.gmra.mxu0 %v56
  %v191 = vpop.f32.mrf.mxu0
  %v192 = vadd.f32 %v42, %v191
  %193 = vmatmul.f32.gmra.mxu0 %v59
  %v194 = vpop.f32.mrf.mxu0
  %v195 = vadd.f32 %v42, %v194
  %196 = vmatmul.f32.gmra.mxu0 %v62
  %v197 = vpop.f32.mrf.mxu0
  %v198 = vadd.f32 %v42, %v197
  %199 = vmatmul.f32.gmra.mxu0 %v65
  %v200 = vpop.f32.mrf.mxu0
  %v201 = vadd.f32 %v42, %v200
  %202 = vmatmul.f32.gmra.mxu0 %v68
  %v203 = vpop.f32.mrf.mxu0
  %v204 = vadd.f32 %v42, %v203
  %205 = vmatmul.f32.gmra.mxu0 %v71
  %v206 = vpop.f32.mrf.mxu0
  %v207 = vadd.f32 %v42, %v206
  %208 = vdwg.mxu0
  %209 = vmatpush.msra.mxu0 0.0
  %210 = vmatpush.msra.mxu0 0.0
  %211 = vmatpush.msra.mxu0 0.0
  %212 = vmatpush.msra.mxu0 0.0
  %213 = vmatpush.msra.mxu0 0.0
  %214 = vmatpush.msra.mxu0 0.0
  %215 = vmatpush.msra.mxu0 0.0
  %216 = vmatpush.msra.mxu0 0.0
  %217 = vmatpush.msra.mxu0 0.0
  %218 = vmatpush.msra.mxu0 0.0
  %219 = vmatpush.msra.mxu0 0.0
  %220 = vmatpush.msra.mxu0 0.0
  %221 = vmatpush.msra.mxu0 0.0
  %222 = vmatpush.msra.mxu0 0.0
  %223 = vmatpush.msra.mxu0 0.0
  %224 = vmatpush.msra.mxu0 %v84
  %225 = vmatmul.f32.gmra.mxu0 %v50
  %v226 = vpop.f32.mrf.mxu0
  %v227 = vadd.f32 %v43, %v226
  %228 = vmatmul.f32.gmra.mxu0 %v53
  %v229 = vpop.f32.mrf.mxu0
  %v230 = vadd.f32 %v43, %v229
  %231 = vmatmul.f32.gmra.mxu0 %v56
  %v232 = vpop.f32.mrf.mxu0
  %v233 = vadd.f32 %v43, %v232
  %234 = vmatmul.f32.gmra.mxu0 %v59
  %v235 = vpop.f32.mrf.mxu0
  %v236 = vadd.f32 %v43, %v235
  %237 = vmatmul.f32.gmra.mxu0 %v62
  %v238 = vpop.f32.mrf.mxu0
  %v239 = vadd.f32 %v43, %v238
  %240 = vmatmul.f32.gmra.mxu0 %v65
  %v241 = vpop.f32.mrf.mxu0
  %v242 = vadd.f32 %v43, %v241
  %243 = vmatmul.f32.gmra.mxu0 %v68
  %v244 = vpop.f32.mrf.mxu0
  %v245 = vadd.f32 %v43, %v244
  %246 = vmatmul.f32.gmra.mxu0 %v71
  %v247 = vpop.f32.mrf.mxu0
  %v248 = vadd.f32 %v43, %v247
  %249 = vdwg.mxu0
  %250 = vst [vmem:[#allocation2] sm:$0xff] %v104
  %251 = vst [vmem:[#allocation2 + $0x8] sm:$0xff] %v145
  %252 = vst [vmem:[#allocation2 + $0x10] sm:$0xff] %v186
  %253 = vst [vmem:[#allocation2 + $0x18] sm:$0xff] %v227
  %254 = vst [vmem:[#allocation2 + $0x20] sm:$0xff] %v107
  %255 = vst [vmem:[#allocation2 + $0x28] sm:$0xff] %v148
  %256 = vst [vmem:[#allocation2 + $0x30] sm:$0xff] %v189
  %257 = vst [vmem:[#allocation2 + $0x38] sm:$0xff] %v230
  %258 = vst [vmem:[#allocation2 + $0x40] sm:$0xff] %v110
  %259 = vst [vmem:[#allocation2 + $0x48] sm:$0xff] %v151
  %260 = vst [vmem:[#allocation2 + $0x50] sm:$0xff] %v192
  %261 = vst [vmem:[#allocation2 + $0x58] sm:$0xff] %v233
  %262 = vst [vmem:[#allocation2 + $0x60] sm:$0xff] %v113
  %263 = vst [vmem:[#allocation2 + $0x68] sm:$0xff] %v154
  %264 = vst [vmem:[#allocation2 + $0x70] sm:$0xff] %v195
  %265 = vst [vmem:[#allocation2 + $0x78] sm:$0xff] %v236
  %266 = vst [vmem:[#allocation2 + $0x80] sm:$0xff] %v116
  %267 = vst [vmem:[#allocation2 + $0x88] sm:$0xff] %v157
  %268 = vst [vmem:[#allocation2 + $0x90] sm:$0xff] %v198
  %269 = vst [vmem:[#allocation2 + $0x98] sm:$0xff] %v239
  %270 = vst [vmem:[#allocation2 + $0xa0] sm:$0xff] %v119
  %271 = vst [vmem:[#allocation2 + $0xa8] sm:$0xff] %v160
  %272 = vst [vmem:[#allocation2 + $0xb0] sm:$0xff] %v201
  %273 = vst [vmem:[#allocation2 + $0xb8] sm:$0xff] %v242
  %274 = vst [vmem:[#allocation2 + $0xc0] sm:$0xff] %v122
  %275 = vst [vmem:[#allocation2 + $0xc8] sm:$0xff] %v163
  %276 = vst [vmem:[#allocation2 + $0xd0] sm:$0xff] %v204
  %277 = vst [vmem:[#allocation2 + $0xd8] sm:$0xff] %v245
  %278 = vst [vmem:[#allocation2 + $0xe0] sm:$0xff] %v125
  %279 = vst [vmem:[#allocation2 + $0xe8] sm:$0xff] %v166
  %280 = vst [vmem:[#allocation2 + $0xf0] sm:$0xff] %v207
  %281 = vst [vmem:[#allocation2 + $0xf8] sm:$0xff] %v248
  %s282 = smul.u32 0, 4
  %s283 = smul.addr %s282, 8
  %s284 = scalar_lea.vmem [#allocation2], %s283
  %v285 = vld [vmem:[%s284] sm:$0xff]
  %v286 = vld [vmem:[%s284 + $0x8] sm:$0xff]
  %v287 = vld [vmem:[%s284 + $0x10] sm:$0xff]
  %v288 = vld [vmem:[%s284 + $0x18] sm:$0xff]
  %v289 = vld [vmem:[%s3] sm:$0xff]
  %v290 = vld [vmem:[%s3 + $0x8] sm:$0xff]
  %v291 = vld [vmem:[%s3 + $0x10] sm:$0xff]
  %v292 = vld [vmem:[%s3 + $0x18] sm:$0xff]
  %v293 = vld [vmem:[%s3 + $0x20] sm:$0xff]
  %v294 = vld [vmem:[%s3 + $0x28] sm:$0xff]
  %v295 = vld [vmem:[%s3 + $0x30] sm:$0xff]
  %v296 = vld [vmem:[%s3 + $0x38] sm:$0xff]
  %v297 = vld [vmem:[%s3 + $0x40] sm:$0xff]
  %v298 = vld [vmem:[%s3 + $0x48] sm:$0xff]
  %v299 = vld [vmem:[%s3 + $0x50] sm:$0xff]
  %v300 = vld [vmem:[%s3 + $0x58] sm:$0xff]
  %v301 = vld [vmem:[%s3 + $0x60] sm:$0xff]
  %v302 = vld [vmem:[%s3 + $0x68] sm:$0xff]
  %v303 = vld [vmem:[%s3 + $0x70] sm:$0xff]
  %v304 = vld [vmem:[%s3 + $0x78] sm:$0xff]
  %v305 = vld [vmem:[%s3 + $0x80] sm:$0xff]
  %v306 = vld [vmem:[%s3 + $0x88] sm:$0xff]
  %v307 = vld [vmem:[%s3 + $0x90] sm:$0xff]
  %v308 = vld [vmem:[%s3 + $0x98] sm:$0xff]
  %v309 = vld [vmem:[%s3 + $0xa0] sm:$0xff]
  %v310 = vld [vmem:[%s3 + $0xa8] sm:$0xff]
  %v311 = vld [vmem:[%s3 + $0xb0] sm:$0xff]
  %v312 = vld [vmem:[%s3 + $0xb8] sm:$0xff]
  %v313 = vld [vmem:[%s3 + $0xc0] sm:$0xff]
  %v314 = vld [vmem:[%s3 + $0xc8] sm:$0xff]
  %v315 = vld [vmem:[%s3 + $0xd0] sm:$0xff]
  %v316 = vld [vmem:[%s3 + $0xd8] sm:$0xff]
  %v317 = vld [vmem:[%s3 + $0xe0] sm:$0xff]
  %v318 = vld [vmem:[%s3 + $0xe8] sm:$0xff]
  %v319 = vld [vmem:[%s3 + $0xf0] sm:$0xff]
  %v320 = vld [vmem:[%s3 + $0xf8] sm:$0xff]
  %v353 = vunpack.c.l.b16 %v289
  %v354 = vunpack.c.h.b16 %v289
  %v355 = vunpack.c.l.b16 %v290
  %v356 = vunpack.c.h.b16 %v290
  %v357 = vunpack.c.l.b16 %v291
  %v358 = vunpack.c.h.b16 %v291
  %v359 = vunpack.c.l.b16 %v292
  %v360 = vunpack.c.h.b16 %v292
  %v361 = vunpack.c.l.b16 %v293
  %v362 = vunpack.c.h.b16 %v293
  %v363 = vunpack.c.l.b16 %v294
  %v364 = vunpack.c.h.b16 %v294
  %v365 = vunpack.c.l.b16 %v295
  %v366 = vunpack.c.h.b16 %v295
  %v367 = vunpack.c.l.b16 %v296
  %v368 = vunpack.c.h.b16 %v296
  %v369 = vunpack.c.l.b16 %v297
  %v370 = vunpack.c.h.b16 %v297
  %v371 = vunpack.c.l.b16 %v298
  %v372 = vunpack.c.h.b16 %v298
  %v373 = vunpack.c.l.b16 %v299
  %v374 = vunpack.c.h.b16 %v299
  %v375 = vunpack.c.l.b16 %v300
  %v376 = vunpack.c.h.b16 %v300
  %v377 = vunpack.c.l.b16 %v301
  %v378 = vunpack.c.h.b16 %v301
  %v379 = vunpack.c.l.b16 %v302
  %v380 = vunpack.c.h.b16 %v302
  %v381 = vunpack.c.l.b16 %v303
  %v382 = vunpack.c.h.b16 %v303
  %v383 = vunpack.c.l.b16 %v304
  %v384 = vunpack.c.h.b16 %v304
  %v385 = vunpack.c.l.b16 %v305
  %v386 = vunpack.c.h.b16 %v305
  %v387 = vunpack.c.l.b16 %v306
  %v388 = vunpack.c.h.b16 %v306
  %v389 = vunpack.c.l.b16 %v307
  %v390 = vunpack.c.h.b16 %v307
  %v391 = vunpack.c.l.b16 %v308
  %v392 = vunpack.c.h.b16 %v308
  %v393 = vunpack.c.l.b16 %v309
  %v394 = vunpack.c.h.b16 %v309
  %v395 = vunpack.c.l.b16 %v310
  %v396 = vunpack.c.h.b16 %v310
  %v397 = vunpack.c.l.b16 %v311
  %v398 = vunpack.c.h.b16 %v311
  %v399 = vunpack.c.l.b16 %v312
  %v400 = vunpack.c.h.b16 %v312
  %v401 = vunpack.c.l.b16 %v313
  %v402 = vunpack.c.h.b16 %v313
  %v403 = vunpack.c.l.b16 %v314
  %v404 = vunpack.c.h.b16 %v314
  %v405 = vunpack.c.l.b16 %v315
  %v406 = vunpack.c.h.b16 %v315
  %v407 = vunpack.c.l.b16 %v316
  %v408 = vunpack.c.h.b16 %v316
  %v409 = vunpack.c.l.b16 %v317
  %v410 = vunpack.c.h.b16 %v317
  %v411 = vunpack.c.l.b16 %v318
  %v412 = vunpack.c.h.b16 %v318
  %v413 = vunpack.c.l.b16 %v319
  %v414 = vunpack.c.h.b16 %v319
  %v415 = vunpack.c.l.b16 %v320
  %v416 = vunpack.c.h.b16 %v320
  %v417 = vpack.c.b16 %v357, %v353
  %v418 = vpack.c.b16 %v358, %v354
  %v419 = vpack.c.b16 %v359, %v355
  %v420 = vpack.c.b16 %v360, %v356
  %v421 = vpack.c.b16 %v365, %v361
  %v422 = vpack.c.b16 %v366, %v362
  %v423 = vpack.c.b16 %v367, %v363
  %v424 = vpack.c.b16 %v368, %v364
  %v425 = vpack.c.b16 %v373, %v369
  %v426 = vpack.c.b16 %v374, %v370
  %v427 = vpack.c.b16 %v375, %v371
  %v428 = vpack.c.b16 %v376, %v372
  %v429 = vpack.c.b16 %v381, %v377
  %v430 = vpack.c.b16 %v382, %v378
  %v431 = vpack.c.b16 %v383, %v379
  %v432 = vpack.c.b16 %v384, %v380
  %v433 = vpack.c.b16 %v389, %v385
  %v434 = vpack.c.b16 %v390, %v386
  %v435 = vpack.c.b16 %v391, %v387
  %v436 = vpack.c.b16 %v392, %v388
  %v437 = vpack.c.b16 %v397, %v393
  %v438 = vpack.c.b16 %v398, %v394
  %v439 = vpack.c.b16 %v399, %v395
  %v440 = vpack.c.b16 %v400, %v396
  %v441 = vpack.c.b16 %v405, %v401
  %v442 = vpack.c.b16 %v406, %v402
  %v443 = vpack.c.b16 %v407, %v403
  %v444 = vpack.c.b16 %v408, %v404
  %v445 = vpack.c.b16 %v413, %v409
  %v446 = vpack.c.b16 %v414, %v410
  %v447 = vpack.c.b16 %v415, %v411
  %v448 = vpack.c.b16 %v416, %v412
  %481 = vmatpush.bf16.msra.mxu0 %v445
  %482 = vmatpush.bf16.msra.mxu0 %v441
  %483 = vmatpush.bf16.msra.mxu0 %v437
  %484 = vmatpush.bf16.msra.mxu0 %v433
  %485 = vmatpush.bf16.msra.mxu0 %v429
  %486 = vmatpush.bf16.msra.mxu0 %v425
  %487 = vmatpush.bf16.msra.mxu0 %v421
  %488 = vmatpush.bf16.msra.mxu0 %v417
  %489 = vmatmul.bf16.gmra.mxu0 0
  %v490 = vpop.f32.mrf.mxu0
  %v491 = vadd.f32 0.0, %v490
  %v492 = vpop.f32.mrf.mxu0
  %493 = vdwg.mxu0
  %494 = vmatpush.bf16.msra.mxu0 %v446
  %495 = vmatpush.bf16.msra.mxu0 %v442
  %496 = vmatpush.bf16.msra.mxu0 %v438
  %497 = vmatpush.bf16.msra.mxu0 %v434
  %498 = vmatpush.bf16.msra.mxu0 %v430
  %499 = vmatpush.bf16.msra.mxu0 %v426
  %500 = vmatpush.bf16.msra.mxu0 %v422
  %501 = vmatpush.bf16.msra.mxu0 %v418
  %502 = vmatmul.bf16.gmra.mxu0 0
  %v503 = vpop.f32.mrf.mxu0
  %v504 = vadd.f32 0.0, %v503
  %v505 = vpop.f32.mrf.mxu0
  %506 = vdwg.mxu0
  %507 = vmatpush.bf16.msra.mxu0 %v447
  %508 = vmatpush.bf16.msra.mxu0 %v443
  %509 = vmatpush.bf16.msra.mxu0 %v439
  %510 = vmatpush.bf16.msra.mxu0 %v435
  %511 = vmatpush.bf16.msra.mxu0 %v431
  %512 = vmatpush.bf16.msra.mxu0 %v427
  %513 = vmatpush.bf16.msra.mxu0 %v423
  %514 = vmatpush.bf16.msra.mxu0 %v419
  %515 = vmatmul.bf16.gmra.mxu0 0
  %v516 = vpop.f32.mrf.mxu0
  %v517 = vadd.f32 0.0, %v516
  %v518 = vpop.f32.mrf.mxu0
  %519 = vdwg.mxu0
  %520 = vmatpush.bf16.msra.mxu0 %v448
  %521 = vmatpush.bf16.msra.mxu0 %v444
  %522 = vmatpush.bf16.msra.mxu0 %v440
  %523 = vmatpush.bf16.msra.mxu0 %v436
  %524 = vmatpush.bf16.msra.mxu0 %v432
  %525 = vmatpush.bf16.msra.mxu0 %v428
  %526 = vmatpush.bf16.msra.mxu0 %v424
  %527 = vmatpush.bf16.msra.mxu0 %v420
  %528 = vmatmul.bf16.gmra.mxu0 0
  %v529 = vpop.f32.mrf.mxu0
  %v530 = vadd.f32 0.0, %v529
  %v531 = vpop.f32.mrf.mxu0
  %532 = vdwg.mxu0
  %v533 = vadd.f32 %v285, %v491
  %v534 = vadd.f32 %v286, %v504
  %v535 = vadd.f32 %v287, %v517
  %v536 = vadd.f32 %v288, %v530
  %v537 = vxor.u32 %v533, 2147483648
  %v538 = vmul.f32 %v537, 1.442695
  %v539 = vpow.pop %v538
  %v540 = vadd.f32 %v539, 1.0
  %v541 = vrcp.pop %v540
  %v542 = vmul.f32 %v540, %v541
  %v543 = vsub.f32 1.0, %v542
  %v544 = vmul.f32 %v541, %v543
  %v545 = vadd.f32 %v541, %v544
  %vm546 = vweird.f32 %v540
  %vm547 = vweird.f32 %v541
  %vm548 = vmor %vm546, %vm547
  %v549 = vsel %vm548, %v541, %v545
  %v550 = vand.u32 2147483647, %v540
  %vm551 = vcmp.eq.f32.partialorder %v550, 8.507059e+37
  %v552 = vand.u32 %v540, 2147483648
  %v553 = vor.u32 1.1754944e-38, %v552
  %v554 = vsel %vm551, %v553, %v549
  %v555 = vmul.f32 1.0, %v554
  %v556 = vxor.u32 %v534, 2147483648
  %v557 = vmul.f32 %v556, 1.442695
  %v558 = vpow.pop %v557
  %v559 = vadd.f32 %v558, 1.0
  %v560 = vrcp.pop %v559
  %v561 = vmul.f32 %v559, %v560
  %v562 = vsub.f32 1.0, %v561
  %v563 = vmul.f32 %v560, %v562
  %v564 = vadd.f32 %v560, %v563
  %vm565 = vweird.f32 %v559
  %vm566 = vweird.f32 %v560
  %vm567 = vmor %vm565, %vm566
  %v568 = vsel %vm567, %v560, %v564
  %v569 = vand.u32 2147483647, %v559
  %vm570 = vcmp.eq.f32.partialorder %v569, 8.507059e+37
  %v571 = vand.u32 %v559, 2147483648
  %v572 = vor.u32 1.1754944e-38, %v571
  %v573 = vsel %vm570, %v572, %v568
  %v574 = vmul.f32 1.0, %v573
  %v575 = vtanh.pop %v535
  %v576 = vxor.u32 %v536, 2147483648
  %v577 = vmul.f32 %v576, 1.442695
  %v578 = vpow.pop %v577
  %v579 = vadd.f32 %v578, 1.0
  %v580 = vrcp.pop %v579
  %v581 = vmul.f32 %v579, %v580
  %v582 = vsub.f32 1.0, %v581
  %v583 = vmul.f32 %v580, %v582
  %v584 = vadd.f32 %v580, %v583
  %vm585 = vweird.f32 %v579
  %vm586 = vweird.f32 %v580
  %vm587 = vmor %vm585, %vm586
  %v588 = vsel %vm587, %v580, %v584
  %v589 = vand.u32 2147483647, %v579
  %vm590 = vcmp.eq.f32.partialorder %v589, 8.507059e+37
  %v591 = vand.u32 %v579, 2147483648
  %v592 = vor.u32 1.1754944e-38, %v591
  %v593 = vsel %vm590, %v592, %v588
  %v594 = vmul.f32 1.0, %v593
  %v595 = vmul.f32 %v574, 0.0
  %v596 = vmul.f32 %v555, %v575
  %v597 = vadd.f32 %v595, %v596
  %v598 = vtanh.pop %v597
  %v599 = vmul.f32 %v594, %v598
  %600 = vst [vmem:[#allocation3] sm:$0xff] %v599
  %s601 = smul.u32 1, 4
  %s602 = smul.addr %s601, 8
  %s603 = scalar_lea.vmem [#allocation2], %s602
  %v604 = vld [vmem:[%s603] sm:$0xff]
  %v605 = vld [vmem:[%s603 + $0x8] sm:$0xff]
  %v606 = vld [vmem:[%s603 + $0x10] sm:$0xff]
  %v607 = vld [vmem:[%s603 + $0x18] sm:$0xff]
  %v608 = vpack.c.bf16 %v599, %v599
  %v609 = vld [vmem:[%s3] sm:$0xff]
  %v610 = vld [vmem:[%s3 + $0x8] sm:$0xff]
  %v611 = vld [vmem:[%s3 + $0x10] sm:$0xff]
  %v612 = vld [vmem:[%s3 + $0x18] sm:$0xff]
  %v613 = vld [vmem:[%s3 + $0x20] sm:$0xff]
  %v614 = vld [vmem:[%s3 + $0x28] sm:$0xff]
  %v615 = vld [vmem:[%s3 + $0x30] sm:$0xff]
  %v616 = vld [vmem:[%s3 + $0x38] sm:$0xff]
  %v617 = vld [vmem:[%s3 + $0x40] sm:$0xff]
  %v618 = vld [vmem:[%s3 + $0x48] sm:$0xff]
  %v619 = vld [vmem:[%s3 + $0x50] sm:$0xff]
  %v620 = vld [vmem:[%s3 + $0x58] sm:$0xff]
  %v621 = vld [vmem:[%s3 + $0x60] sm:$0xff]
  %v622 = vld [vmem:[%s3 + $0x68] sm:$0xff]
  %v623 = vld [vmem:[%s3 + $0x70] sm:$0xff]
  %v624 = vld [vmem:[%s3 + $0x78] sm:$0xff]
  %v625 = vld [vmem:[%s3 + $0x80] sm:$0xff]
  %v626 = vld [vmem:[%s3 + $0x88] sm:$0xff]
  %v627 = vld [vmem:[%s3 + $0x90] sm:$0xff]
  %v628 = vld [vmem:[%s3 + $0x98] sm:$0xff]
  %v629 = vld [vmem:[%s3 + $0xa0] sm:$0xff]
  %v630 = vld [vmem:[%s3 + $0xa8] sm:$0xff]
  %v631 = vld [vmem:[%s3 + $0xb0] sm:$0xff]
  %v632 = vld [vmem:[%s3 + $0xb8] sm:$0xff]
  %v633 = vld [vmem:[%s3 + $0xc0] sm:$0xff]
  %v634 = vld [vmem:[%s3 + $0xc8] sm:$0xff]
  %v635 = vld [vmem:[%s3 + $0xd0] sm:$0xff]
  %v636 = vld [vmem:[%s3 + $0xd8] sm:$0xff]
  %v637 = vld [vmem:[%s3 + $0xe0] sm:$0xff]
  %v638 = vld [vmem:[%s3 + $0xe8] sm:$0xff]
  %v639 = vld [vmem:[%s3 + $0xf0] sm:$0xff]
  %v640 = vld [vmem:[%s3 + $0xf8] sm:$0xff]
  %v673 = vunpack.c.l.b16 %v609
  %v674 = vunpack.c.h.b16 %v609
  %v675 = vunpack.c.l.b16 %v610
  %v676 = vunpack.c.h.b16 %v610
  %v677 = vunpack.c.l.b16 %v611
  %v678 = vunpack.c.h.b16 %v611
  %v679 = vunpack.c.l.b16 %v612
  %v680 = vunpack.c.h.b16 %v612
  %v681 = vunpack.c.l.b16 %v613
  %v682 = vunpack.c.h.b16 %v613
  %v683 = vunpack.c.l.b16 %v614
  %v684 = vunpack.c.h.b16 %v614
  %v685 = vunpack.c.l.b16 %v615
  %v686 = vunpack.c.h.b16 %v615
  %v687 = vunpack.c.l.b16 %v616
  %v688 = vunpack.c.h.b16 %v616
  %v689 = vunpack.c.l.b16 %v617
  %v690 = vunpack.c.h.b16 %v617
  %v691 = vunpack.c.l.b16 %v618
  %v692 = vunpack.c.h.b16 %v618
  %v693 = vunpack.c.l.b16 %v619
  %v694 = vunpack.c.h.b16 %v619
  %v695 = vunpack.c.l.b16 %v620
  %v696 = vunpack.c.h.b16 %v620
  %v697 = vunpack.c.l.b16 %v621
  %v698 = vunpack.c.h.b16 %v621
  %v699 = vunpack.c.l.b16 %v622
  %v700 = vunpack.c.h.b16 %v622
  %v701 = vunpack.c.l.b16 %v623
  %v702 = vunpack.c.h.b16 %v623
  %v703 = vunpack.c.l.b16 %v624
  %v704 = vunpack.c.h.b16 %v624
  %v705 = vunpack.c.l.b16 %v625
  %v706 = vunpack.c.h.b16 %v625
  %v707 = vunpack.c.l.b16 %v626
  %v708 = vunpack.c.h.b16 %v626
  %v709 = vunpack.c.l.b16 %v627
  %v710 = vunpack.c.h.b16 %v627
  %v711 = vunpack.c.l.b16 %v628
  %v712 = vunpack.c.h.b16 %v628
  %v713 = vunpack.c.l.b16 %v629
  %v714 = vunpack.c.h.b16 %v629
  %v715 = vunpack.c.l.b16 %v630
  %v716 = vunpack.c.h.b16 %v630
  %v717 = vunpack.c.l.b16 %v631
  %v718 = vunpack.c.h.b16 %v631
  %v719 = vunpack.c.l.b16 %v632
  %v720 = vunpack.c.h.b16 %v632
  %v721 = vunpack.c.l.b16 %v633
  %v722 = vunpack.c.h.b16 %v633
  %v723 = vunpack.c.l.b16 %v634
  %v724 = vunpack.c.h.b16 %v634
  %v725 = vunpack.c.l.b16 %v635
  %v726 = vunpack.c.h.b16 %v635
  %v727 = vunpack.c.l.b16 %v636
  %v728 = vunpack.c.h.b16 %v636
  %v729 = vunpack.c.l.b16 %v637
  %v730 = vunpack.c.h.b16 %v637
  %v731 = vunpack.c.l.b16 %v638
  %v732 = vunpack.c.h.b16 %v638
  %v733 = vunpack.c.l.b16 %v639
  %v734 = vunpack.c.h.b16 %v639
  %v735 = vunpack.c.l.b16 %v640
  %v736 = vunpack.c.h.b16 %v640
  %v737 = vpack.c.b16 %v677, %v673
  %v738 = vpack.c.b16 %v678, %v674
  %v739 = vpack.c.b16 %v679, %v675
  %v740 = vpack.c.b16 %v680, %v676
  %v741 = vpack.c.b16 %v685, %v681
  %v742 = vpack.c.b16 %v686, %v682
  %v743 = vpack.c.b16 %v687, %v683
  %v744 = vpack.c.b16 %v688, %v684
  %v745 = vpack.c.b16 %v693, %v689
  %v746 = vpack.c.b16 %v694, %v690
  %v747 = vpack.c.b16 %v695, %v691
  %v748 = vpack.c.b16 %v696, %v692
  %v749 = vpack.c.b16 %v701, %v697
  %v750 = vpack.c.b16 %v702, %v698
  %v751 = vpack.c.b16 %v703, %v699
  %v752 = vpack.c.b16 %v704, %v700
  %v753 = vpack.c.b16 %v709, %v705
  %v754 = vpack.c.b16 %v710, %v706
  %v755 = vpack.c.b16 %v711, %v707
  %v756 = vpack.c.b16 %v712, %v708
  %v757 = vpack.c.b16 %v717, %v713
  %v758 = vpack.c.b16 %v718, %v714
  %v759 = vpack.c.b16 %v719, %v715
  %v760 = vpack.c.b16 %v720, %v716
  %v761 = vpack.c.b16 %v725, %v721
  %v762 = vpack.c.b16 %v726, %v722
  %v763 = vpack.c.b16 %v727, %v723
  %v764 = vpack.c.b16 %v728, %v724
  %v765 = vpack.c.b16 %v733, %v729
  %v766 = vpack.c.b16 %v734, %v730
  %v767 = vpack.c.b16 %v735, %v731
  %v768 = vpack.c.b16 %v736, %v732
  %801 = vmatpush.bf16.msra.mxu0 %v765
  %802 = vmatpush.bf16.msra.mxu0 %v761
  %803 = vmatpush.bf16.msra.mxu0 %v757
  %804 = vmatpush.bf16.msra.mxu0 %v753
  %805 = vmatpush.bf16.msra.mxu0 %v749
  %806 = vmatpush.bf16.msra.mxu0 %v745
  %807 = vmatpush.bf16.msra.mxu0 %v741
  %808 = vmatpush.bf16.msra.mxu0 %v737
  %809 = vmatmul.bf16.gmra.mxu0 %v608
  %v810 = vpop.f32.mrf.mxu0
  %v811 = vadd.f32 0.0, %v810
  %v812 = vpop.f32.mrf.mxu0
  %813 = vdwg.mxu0
  %814 = vmatpush.bf16.msra.mxu0 %v766
  %815 = vmatpush.bf16.msra.mxu0 %v762
  %816 = vmatpush.bf16.msra.mxu0 %v758
  %817 = vmatpush.bf16.msra.mxu0 %v754
  %818 = vmatpush.bf16.msra.mxu0 %v750
  %819 = vmatpush.bf16.msra.mxu0 %v746
  %820 = vmatpush.bf16.msra.mxu0 %v742
  %821 = vmatpush.bf16.msra.mxu0 %v738
  %822 = vmatmul.bf16.gmra.mxu0 %v608
  %v823 = vpop.f32.mrf.mxu0
  %v824 = vadd.f32 0.0, %v823
  %v825 = vpop.f32.mrf.mxu0
  %826 = vdwg.mxu0
  %827 = vmatpush.bf16.msra.mxu0 %v767
  %828 = vmatpush.bf16.msra.mxu0 %v763
  %829 = vmatpush.bf16.msra.mxu0 %v759
  %830 = vmatpush.bf16.msra.mxu0 %v755
  %831 = vmatpush.bf16.msra.mxu0 %v751
  %832 = vmatpush.bf16.msra.mxu0 %v747
  %833 = vmatpush.bf16.msra.mxu0 %v743
  %834 = vmatpush.bf16.msra.mxu0 %v739
  %835 = vmatmul.bf16.gmra.mxu0 %v608
  %v836 = vpop.f32.mrf.mxu0
  %v837 = vadd.f32 0.0, %v836
  %v838 = vpop.f32.mrf.mxu0
  %839 = vdwg.mxu0
  %840 = vmatpush.bf16.msra.mxu0 %v768
  %841 = vmatpush.bf16.msra.mxu0 %v764
  %842 = vmatpush.bf16.msra.mxu0 %v760
  %843 = vmatpush.bf16.msra.mxu0 %v756
  %844 = vmatpush.bf16.msra.mxu0 %v752
  %845 = vmatpush.bf16.msra.mxu0 %v748
  %846 = vmatpush.bf16.msra.mxu0 %v744
  %847 = vmatpush.bf16.msra.mxu0 %v740
  %848 = vmatmul.bf16.gmra.mxu0 %v608
  %v849 = vpop.f32.mrf.mxu0
  %v850 = vadd.f32 0.0, %v849
  %v851 = vpop.f32.mrf.mxu0
  %852 = vdwg.mxu0
  %v853 = vadd.f32 %v604, %v811
  %v854 = vadd.f32 %v605, %v824
  %v855 = vadd.f32 %v606, %v837
  %v856 = vadd.f32 %v607, %v850
  %v857 = vxor.u32 %v853, 2147483648
  %v858 = vmul.f32 %v857, 1.442695
  %v859 = vpow.pop %v858
  %v860 = vadd.f32 %v859, 1.0
  %v861 = vrcp.pop %v860
  %v862 = vmul.f32 %v860, %v861
  %v863 = vsub.f32 1.0, %v862
  %v864 = vmul.f32 %v861, %v863
  %v865 = vadd.f32 %v861, %v864
  %vm866 = vweird.f32 %v860
  %vm867 = vweird.f32 %v861
  %vm868 = vmor %vm866, %vm867
  %v869 = vsel %vm868, %v861, %v865
  %v870 = vand.u32 2147483647, %v860
  %vm871 = vcmp.eq.f32.partialorder %v870, 8.507059e+37
  %v872 = vand.u32 %v860, 2147483648
  %v873 = vor.u32 1.1754944e-38, %v872
  %v874 = vsel %vm871, %v873, %v869
  %v875 = vmul.f32 1.0, %v874
  %v876 = vxor.u32 %v854, 2147483648
  %v877 = vmul.f32 %v876, 1.442695
  %v878 = vpow.pop %v877
  %v879 = vadd.f32 %v878, 1.0
  %v880 = vrcp.pop %v879
  %v881 = vmul.f32 %v879, %v880
  %v882 = vsub.f32 1.0, %v881
  %v883 = vmul.f32 %v880, %v882
  %v884 = vadd.f32 %v880, %v883
  %vm885 = vweird.f32 %v879
  %vm886 = vweird.f32 %v880
  %vm887 = vmor %vm885, %vm886
  %v888 = vsel %vm887, %v880, %v884
  %v889 = vand.u32 2147483647, %v879
  %vm890 = vcmp.eq.f32.partialorder %v889, 8.507059e+37
  %v891 = vand.u32 %v879, 2147483648
  %v892 = vor.u32 1.1754944e-38, %v891
  %v893 = vsel %vm890, %v892, %v888
  %v894 = vmul.f32 1.0, %v893
  %v895 = vtanh.pop %v855
  %v896 = vxor.u32 %v856, 2147483648
  %v897 = vmul.f32 %v896, 1.442695
  %v898 = vpow.pop %v897
  %v899 = vadd.f32 %v898, 1.0
  %v900 = vrcp.pop %v899
  %v901 = vmul.f32 %v899, %v900
  %v902 = vsub.f32 1.0, %v901
  %v903 = vmul.f32 %v900, %v902
  %v904 = vadd.f32 %v900, %v903
  %vm905 = vweird.f32 %v899
  %vm906 = vweird.f32 %v900
  %vm907 = vmor %vm905, %vm906
  %v908 = vsel %vm907, %v900, %v904
  %v909 = vand.u32 2147483647, %v899
  %vm910 = vcmp.eq.f32.partialorder %v909, 8.507059e+37
  %v911 = vand.u32 %v899, 2147483648
  %v912 = vor.u32 1.1754944e-38, %v911
  %v913 = vsel %vm910, %v912, %v908
  %v914 = vmul.f32 1.0, %v913
  %v915 = vmul.f32 %v894, %v597
  %v916 = vmul.f32 %v875, %v895
  %v917 = vadd.f32 %v915, %v916
  %v918 = vtanh.pop %v917
  %v919 = vmul.f32 %v914, %v918
  %s920 = scalar_lea.vmem [#allocation3], 8
  %921 = vst [vmem:[%s920] sm:$0xff] %v919
  %s922 = smul.u32 2, 4
  %s923 = smul.addr %s922, 8
  %s924 = scalar_lea.vmem [#allocation2], %s923
  %v925 = vld [vmem:[%s924] sm:$0xff]
  %v926 = vld [vmem:[%s924 + $0x8] sm:$0xff]
  %v927 = vld [vmem:[%s924 + $0x10] sm:$0xff]
  %v928 = vld [vmem:[%s924 + $0x18] sm:$0xff]
  %v929 = vpack.c.bf16 %v919, %v919
  %v930 = vld [vmem:[%s3] sm:$0xff]
  %v931 = vld [vmem:[%s3 + $0x8] sm:$0xff]
  %v932 = vld [vmem:[%s3 + $0x10] sm:$0xff]
  %v933 = vld [vmem:[%s3 + $0x18] sm:$0xff]
  %v934 = vld [vmem:[%s3 + $0x20] sm:$0xff]
  %v935 = vld [vmem:[%s3 + $0x28] sm:$0xff]
  %v936 = vld [vmem:[%s3 + $0x30] sm:$0xff]
  %v937 = vld [vmem:[%s3 + $0x38] sm:$0xff]
  %v938 = vld [vmem:[%s3 + $0x40] sm:$0xff]
  %v939 = vld [vmem:[%s3 + $0x48] sm:$0xff]
  %v940 = vld [vmem:[%s3 + $0x50] sm:$0xff]
  %v941 = vld [vmem:[%s3 + $0x58] sm:$0xff]
  %v942 = vld [vmem:[%s3 + $0x60] sm:$0xff]
  %v943 = vld [vmem:[%s3 + $0x68] sm:$0xff]
  %v944 = vld [vmem:[%s3 + $0x70] sm:$0xff]
  %v945 = vld [vmem:[%s3 + $0x78] sm:$0xff]
  %v946 = vld [vmem:[%s3 + $0x80] sm:$0xff]
  %v947 = vld [vmem:[%s3 + $0x88] sm:$0xff]
  %v948 = vld [vmem:[%s3 + $0x90] sm:$0xff]
  %v949 = vld [vmem:[%s3 + $0x98] sm:$0xff]
  %v950 = vld [vmem:[%s3 + $0xa0] sm:$0xff]
  %v951 = vld [vmem:[%s3 + $0xa8] sm:$0xff]
  %v952 = vld [vmem:[%s3 + $0xb0] sm:$0xff]
  %v953 = vld [vmem:[%s3 + $0xb8] sm:$0xff]
  %v954 = vld [vmem:[%s3 + $0xc0] sm:$0xff]
  %v955 = vld [vmem:[%s3 + $0xc8] sm:$0xff]
  %v956 = vld [vmem:[%s3 + $0xd0] sm:$0xff]
  %v957 = vld [vmem:[%s3 + $0xd8] sm:$0xff]
  %v958 = vld [vmem:[%s3 + $0xe0] sm:$0xff]
  %v959 = vld [vmem:[%s3 + $0xe8] sm:$0xff]
  %v960 = vld [vmem:[%s3 + $0xf0] sm:$0xff]
  %v961 = vld [vmem:[%s3 + $0xf8] sm:$0xff]
  %v994 = vunpack.c.l.b16 %v930
  %v995 = vunpack.c.h.b16 %v930
  %v996 = vunpack.c.l.b16 %v931
  %v997 = vunpack.c.h.b16 %v931
  %v998 = vunpack.c.l.b16 %v932
  %v999 = vunpack.c.h.b16 %v932
  %v1000 = vunpack.c.l.b16 %v933
  %v1001 = vunpack.c.h.b16 %v933
  %v1002 = vunpack.c.l.b16 %v934
  %v1003 = vunpack.c.h.b16 %v934
  %v1004 = vunpack.c.l.b16 %v935
  %v1005 = vunpack.c.h.b16 %v935
  %v1006 = vunpack.c.l.b16 %v936
  %v1007 = vunpack.c.h.b16 %v936
  %v1008 = vunpack.c.l.b16 %v937
  %v1009 = vunpack.c.h.b16 %v937
  %v1010 = vunpack.c.l.b16 %v938
  %v1011 = vunpack.c.h.b16 %v938
  %v1012 = vunpack.c.l.b16 %v939
  %v1013 = vunpack.c.h.b16 %v939
  %v1014 = vunpack.c.l.b16 %v940
  %v1015 = vunpack.c.h.b16 %v940
  %v1016 = vunpack.c.l.b16 %v941
  %v1017 = vunpack.c.h.b16 %v941
  %v1018 = vunpack.c.l.b16 %v942
  %v1019 = vunpack.c.h.b16 %v942
  %v1020 = vunpack.c.l.b16 %v943
  %v1021 = vunpack.c.h.b16 %v943
  %v1022 = vunpack.c.l.b16 %v944
  %v1023 = vunpack.c.h.b16 %v944
  %v1024 = vunpack.c.l.b16 %v945
  %v1025 = vunpack.c.h.b16 %v945
  %v1026 = vunpack.c.l.b16 %v946
  %v1027 = vunpack.c.h.b16 %v946
  %v1028 = vunpack.c.l.b16 %v947
  %v1029 = vunpack.c.h.b16 %v947
  %v1030 = vunpack.c.l.b16 %v948
  %v1031 = vunpack.c.h.b16 %v948
  %v1032 = vunpack.c.l.b16 %v949
  %v1033 = vunpack.c.h.b16 %v949
  %v1034 = vunpack.c.l.b16 %v950
  %v1035 = vunpack.c.h.b16 %v950
  %v1036 = vunpack.c.l.b16 %v951
  %v1037 = vunpack.c.h.b16 %v951
  %v1038 = vunpack.c.l.b16 %v952
  %v1039 = vunpack.c.h.b16 %v952
  %v1040 = vunpack.c.l.b16 %v953
  %v1041 = vunpack.c.h.b16 %v953
  %v1042 = vunpack.c.l.b16 %v954
  %v1043 = vunpack.c.h.b16 %v954
  %v1044 = vunpack.c.l.b16 %v955
  %v1045 = vunpack.c.h.b16 %v955
  %v1046 = vunpack.c.l.b16 %v956
  %v1047 = vunpack.c.h.b16 %v956
  %v1048 = vunpack.c.l.b16 %v957
  %v1049 = vunpack.c.h.b16 %v957
  %v1050 = vunpack.c.l.b16 %v958
  %v1051 = vunpack.c.h.b16 %v958
  %v1052 = vunpack.c.l.b16 %v959
  %v1053 = vunpack.c.h.b16 %v959
  %v1054 = vunpack.c.l.b16 %v960
  %v1055 = vunpack.c.h.b16 %v960
  %v1056 = vunpack.c.l.b16 %v961
  %v1057 = vunpack.c.h.b16 %v961
  %v1058 = vpack.c.b16 %v998, %v994
  %v1059 = vpack.c.b16 %v999, %v995
  %v1060 = vpack.c.b16 %v1000, %v996
  %v1061 = vpack.c.b16 %v1001, %v997
  %v1062 = vpack.c.b16 %v1006, %v1002
  %v1063 = vpack.c.b16 %v1007, %v1003
  %v1064 = vpack.c.b16 %v1008, %v1004
  %v1065 = vpack.c.b16 %v1009, %v1005
  %v1066 = vpack.c.b16 %v1014, %v1010
  %v1067 = vpack.c.b16 %v1015, %v1011
  %v1068 = vpack.c.b16 %v1016, %v1012
  %v1069 = vpack.c.b16 %v1017, %v1013
  %v1070 = vpack.c.b16 %v1022, %v1018
  %v1071 = vpack.c.b16 %v1023, %v1019
  %v1072 = vpack.c.b16 %v1024, %v1020
  %v1073 = vpack.c.b16 %v1025, %v1021
  %v1074 = vpack.c.b16 %v1030, %v1026
  %v1075 = vpack.c.b16 %v1031, %v1027
  %v1076 = vpack.c.b16 %v1032, %v1028
  %v1077 = vpack.c.b16 %v1033, %v1029
  %v1078 = vpack.c.b16 %v1038, %v1034
  %v1079 = vpack.c.b16 %v1039, %v1035
  %v1080 = vpack.c.b16 %v1040, %v1036
  %v1081 = vpack.c.b16 %v1041, %v1037
  %v1082 = vpack.c.b16 %v1046, %v1042
  %v1083 = vpack.c.b16 %v1047, %v1043
  %v1084 = vpack.c.b16 %v1048, %v1044
  %v1085 = vpack.c.b16 %v1049, %v1045
  %v1086 = vpack.c.b16 %v1054, %v1050
  %v1087 = vpack.c.b16 %v1055, %v1051
  %v1088 = vpack.c.b16 %v1056, %v1052
  %v1089 = vpack.c.b16 %v1057, %v1053
  %1122 = vmatpush.bf16.msra.mxu0 %v1086
  %1123 = vmatpush.bf16.msra.mxu0 %v1082
  %1124 = vmatpush.bf16.msra.mxu0 %v1078
  %1125 = vmatpush.bf16.msra.mxu0 %v1074
  %1126 = vmatpush.bf16.msra.mxu0 %v1070
  %1127 = vmatpush.bf16.msra.mxu0 %v1066
  %1128 = vmatpush.bf16.msra.mxu0 %v1062
  %1129 = vmatpush.bf16.msra.mxu0 %v1058
  %1130 = vmatmul.bf16.gmra.mxu0 %v929
  %v1131 = vpop.f32.mrf.mxu0
  %v1132 = vadd.f32 0.0, %v1131
  %v1133 = vpop.f32.mrf.mxu0
  %1134 = vdwg.mxu0
  %1135 = vmatpush.bf16.msra.mxu0 %v1087
  %1136 = vmatpush.bf16.msra.mxu0 %v1083
  %1137 = vmatpush.bf16.msra.mxu0 %v1079
  %1138 = vmatpush.bf16.msra.mxu0 %v1075
  %1139 = vmatpush.bf16.msra.mxu0 %v1071
  %1140 = vmatpush.bf16.msra.mxu0 %v1067
  %1141 = vmatpush.bf16.msra.mxu0 %v1063
  %1142 = vmatpush.bf16.msra.mxu0 %v1059
  %1143 = vmatmul.bf16.gmra.mxu0 %v929
  %v1144 = vpop.f32.mrf.mxu0
  %v1145 = vadd.f32 0.0, %v1144
  %v1146 = vpop.f32.mrf.mxu0
  %1147 = vdwg.mxu0
  %1148 = vmatpush.bf16.msra.mxu0 %v1088
  %1149 = vmatpush.bf16.msra.mxu0 %v1084
  %1150 = vmatpush.bf16.msra.mxu0 %v1080
  %1151 = vmatpush.bf16.msra.mxu0 %v1076
  %1152 = vmatpush.bf16.msra.mxu0 %v1072
  %1153 = vmatpush.bf16.msra.mxu0 %v1068
  %1154 = vmatpush.bf16.msra.mxu0 %v1064
  %1155 = vmatpush.bf16.msra.mxu0 %v1060
  %1156 = vmatmul.bf16.gmra.mxu0 %v929
  %v1157 = vpop.f32.mrf.mxu0
  %v1158 = vadd.f32 0.0, %v1157
  %v1159 = vpop.f32.mrf.mxu0
  %1160 = vdwg.mxu0
  %1161 = vmatpush.bf16.msra.mxu0 %v1089
  %1162 = vmatpush.bf16.msra.mxu0 %v1085
  %1163 = vmatpush.bf16.msra.mxu0 %v1081
  %1164 = vmatpush.bf16.msra.mxu0 %v1077
  %1165 = vmatpush.bf16.msra.mxu0 %v1073
  %1166 = vmatpush.bf16.msra.mxu0 %v1069
  %1167 = vmatpush.bf16.msra.mxu0 %v1065
  %1168 = vmatpush.bf16.msra.mxu0 %v1061
  %1169 = vmatmul.bf16.gmra.mxu0 %v929
  %v1170 = vpop.f32.mrf.mxu0
  %v1171 = vadd.f32 0.0, %v1170
  %v1172 = vpop.f32.mrf.mxu0
  %1173 = vdwg.mxu0
  %v1174 = vadd.f32 %v925, %v1132
  %v1175 = vadd.f32 %v926, %v1145
  %v1176 = vadd.f32 %v927, %v1158
  %v1177 = vadd.f32 %v928, %v1171
  %v1178 = vxor.u32 %v1174, 2147483648
  %v1179 = vmul.f32 %v1178, 1.442695
  %v1180 = vpow.pop %v1179
  %v1181 = vadd.f32 %v1180, 1.0
  %v1182 = vrcp.pop %v1181
  %v1183 = vmul.f32 %v1181, %v1182
  %v1184 = vsub.f32 1.0, %v1183
  %v1185 = vmul.f32 %v1182, %v1184
  %v1186 = vadd.f32 %v1182, %v1185
  %vm1187 = vweird.f32 %v1181
  %vm1188 = vweird.f32 %v1182
  %vm1189 = vmor %vm1187, %vm1188
  %v1190 = vsel %vm1189, %v1182, %v1186
  %v1191 = vand.u32 2147483647, %v1181
  %vm1192 = vcmp.eq.f32.partialorder %v1191, 8.507059e+37
  %v1193 = vand.u32 %v1181, 2147483648
  %v1194 = vor.u32 1.1754944e-38, %v1193
  %v1195 = vsel %vm1192, %v1194, %v1190
  %v1196 = vmul.f32 1.0, %v1195
  %v1197 = vxor.u32 %v1175, 2147483648
  %v1198 = vmul.f32 %v1197, 1.442695
  %v1199 = vpow.pop %v1198
  %v1200 = vadd.f32 %v1199, 1.0
  %v1201 = vrcp.pop %v1200
  %v1202 = vmul.f32 %v1200, %v1201
  %v1203 = vsub.f32 1.0, %v1202
  %v1204 = vmul.f32 %v1201, %v1203
  %v1205 = vadd.f32 %v1201, %v1204
  %vm1206 = vweird.f32 %v1200
  %vm1207 = vweird.f32 %v1201
  %vm1208 = vmor %vm1206, %vm1207
  %v1209 = vsel %vm1208, %v1201, %v1205
  %v1210 = vand.u32 2147483647, %v1200
  %vm1211 = vcmp.eq.f32.partialorder %v1210, 8.507059e+37
  %v1212 = vand.u32 %v1200, 2147483648
  %v1213 = vor.u32 1.1754944e-38, %v1212
  %v1214 = vsel %vm1211, %v1213, %v1209
  %v1215 = vmul.f32 1.0, %v1214
  %v1216 = vtanh.pop %v1176
  %v1217 = vxor.u32 %v1177, 2147483648
  %v1218 = vmul.f32 %v1217, 1.442695
  %v1219 = vpow.pop %v1218
  %v1220 = vadd.f32 %v1219, 1.0
  %v1221 = vrcp.pop %v1220
  %v1222 = vmul.f32 %v1220, %v1221
  %v1223 = vsub.f32 1.0, %v1222
  %v1224 = vmul.f32 %v1221, %v1223
  %v1225 = vadd.f32 %v1221, %v1224
  %vm1226 = vweird.f32 %v1220
  %vm1227 = vweird.f32 %v1221
  %vm1228 = vmor %vm1226, %vm1227
  %v1229 = vsel %vm1228, %v1221, %v1225
  %v1230 = vand.u32 2147483647, %v1220
  %vm1231 = vcmp.eq.f32.partialorder %v1230, 8.507059e+37
  %v1232 = vand.u32 %v1220, 2147483648
  %v1233 = vor.u32 1.1754944e-38, %v1232
  %v1234 = vsel %vm1231, %v1233, %v1229
  %v1235 = vmul.f32 1.0, %v1234
  %v1236 = vmul.f32 %v1215, %v917
  %v1237 = vmul.f32 %v1196, %v1216
  %v1238 = vadd.f32 %v1236, %v1237
  %v1239 = vtanh.pop %v1238
  %v1240 = vmul.f32 %v1235, %v1239
  %s1241 = scalar_lea.vmem [#allocation3], 16
  %1242 = vst [vmem:[%s1241] sm:$0xff] %v1240
  %s1243 = smul.u32 3, 4
  %s1244 = smul.addr %s1243, 8
  %s1245 = scalar_lea.vmem [#allocation2], %s1244
  %v1246 = vld [vmem:[%s1245] sm:$0xff]
  %v1247 = vld [vmem:[%s1245 + $0x8] sm:$0xff]
  %v1248 = vld [vmem:[%s1245 + $0x10] sm:$0xff]
  %v1249 = vld [vmem:[%s1245 + $0x18] sm:$0xff]
  %v1250 = vpack.c.bf16 %v1240, %v1240
  %v1251 = vld [vmem:[%s3] sm:$0xff]
  %v1252 = vld [vmem:[%s3 + $0x8] sm:$0xff]
  %v1253 = vld [vmem:[%s3 + $0x10] sm:$0xff]
  %v1254 = vld [vmem:[%s3 + $0x18] sm:$0xff]
  %v1255 = vld [vmem:[%s3 + $0x20] sm:$0xff]
  %v1256 = vld [vmem:[%s3 + $0x28] sm:$0xff]
  %v1257 = vld [vmem:[%s3 + $0x30] sm:$0xff]
  %v1258 = vld [vmem:[%s3 + $0x38] sm:$0xff]
  %v1259 = vld [vmem:[%s3 + $0x40] sm:$0xff]
  %v1260 = vld [vmem:[%s3 + $0x48] sm:$0xff]
  %v1261 = vld [vmem:[%s3 + $0x50] sm:$0xff]
  %v1262 = vld [vmem:[%s3 + $0x58] sm:$0xff]
  %v1263 = vld [vmem:[%s3 + $0x60] sm:$0xff]
  %v1264 = vld [vmem:[%s3 + $0x68] sm:$0xff]
  %v1265 = vld [vmem:[%s3 + $0x70] sm:$0xff]
  %v1266 = vld [vmem:[%s3 + $0x78] sm:$0xff]
  %v1267 = vld [vmem:[%s3 + $0x80] sm:$0xff]
  %v1268 = vld [vmem:[%s3 + $0x88] sm:$0xff]
  %v1269 = vld [vmem:[%s3 + $0x90] sm:$0xff]
  %v1270 = vld [vmem:[%s3 + $0x98] sm:$0xff]
  %v1271 = vld [vmem:[%s3 + $0xa0] sm:$0xff]
  %v1272 = vld [vmem:[%s3 + $0xa8] sm:$0xff]
  %v1273 = vld [vmem:[%s3 + $0xb0] sm:$0xff]
  %v1274 = vld [vmem:[%s3 + $0xb8] sm:$0xff]
  %v1275 = vld [vmem:[%s3 + $0xc0] sm:$0xff]
  %v1276 = vld [vmem:[%s3 + $0xc8] sm:$0xff]
  %v1277 = vld [vmem:[%s3 + $0xd0] sm:$0xff]
  %v1278 = vld [vmem:[%s3 + $0xd8] sm:$0xff]
  %v1279 = vld [vmem:[%s3 + $0xe0] sm:$0xff]
  %v1280 = vld [vmem:[%s3 + $0xe8] sm:$0xff]
  %v1281 = vld [vmem:[%s3 + $0xf0] sm:$0xff]
  %v1282 = vld [vmem:[%s3 + $0xf8] sm:$0xff]
  %v1315 = vunpack.c.l.b16 %v1251
  %v1316 = vunpack.c.h.b16 %v1251
  %v1317 = vunpack.c.l.b16 %v1252
  %v1318 = vunpack.c.h.b16 %v1252
  %v1319 = vunpack.c.l.b16 %v1253
  %v1320 = vunpack.c.h.b16 %v1253
  %v1321 = vunpack.c.l.b16 %v1254
  %v1322 = vunpack.c.h.b16 %v1254
  %v1323 = vunpack.c.l.b16 %v1255
  %v1324 = vunpack.c.h.b16 %v1255
  %v1325 = vunpack.c.l.b16 %v1256
  %v1326 = vunpack.c.h.b16 %v1256
  %v1327 = vunpack.c.l.b16 %v1257
  %v1328 = vunpack.c.h.b16 %v1257
  %v1329 = vunpack.c.l.b16 %v1258
  %v1330 = vunpack.c.h.b16 %v1258
  %v1331 = vunpack.c.l.b16 %v1259
  %v1332 = vunpack.c.h.b16 %v1259
  %v1333 = vunpack.c.l.b16 %v1260
  %v1334 = vunpack.c.h.b16 %v1260
  %v1335 = vunpack.c.l.b16 %v1261
  %v1336 = vunpack.c.h.b16 %v1261
  %v1337 = vunpack.c.l.b16 %v1262
  %v1338 = vunpack.c.h.b16 %v1262
  %v1339 = vunpack.c.l.b16 %v1263
  %v1340 = vunpack.c.h.b16 %v1263
  %v1341 = vunpack.c.l.b16 %v1264
  %v1342 = vunpack.c.h.b16 %v1264
  %v1343 = vunpack.c.l.b16 %v1265
  %v1344 = vunpack.c.h.b16 %v1265
  %v1345 = vunpack.c.l.b16 %v1266
  %v1346 = vunpack.c.h.b16 %v1266
  %v1347 = vunpack.c.l.b16 %v1267
  %v1348 = vunpack.c.h.b16 %v1267
  %v1349 = vunpack.c.l.b16 %v1268
  %v1350 = vunpack.c.h.b16 %v1268
  %v1351 = vunpack.c.l.b16 %v1269
  %v1352 = vunpack.c.h.b16 %v1269
  %v1353 = vunpack.c.l.b16 %v1270
  %v1354 = vunpack.c.h.b16 %v1270
  %v1355 = vunpack.c.l.b16 %v1271
  %v1356 = vunpack.c.h.b16 %v1271
  %v1357 = vunpack.c.l.b16 %v1272
  %v1358 = vunpack.c.h.b16 %v1272
  %v1359 = vunpack.c.l.b16 %v1273
  %v1360 = vunpack.c.h.b16 %v1273
  %v1361 = vunpack.c.l.b16 %v1274
  %v1362 = vunpack.c.h.b16 %v1274
  %v1363 = vunpack.c.l.b16 %v1275
  %v1364 = vunpack.c.h.b16 %v1275
  %v1365 = vunpack.c.l.b16 %v1276
  %v1366 = vunpack.c.h.b16 %v1276
  %v1367 = vunpack.c.l.b16 %v1277
  %v1368 = vunpack.c.h.b16 %v1277
  %v1369 = vunpack.c.l.b16 %v1278
  %v1370 = vunpack.c.h.b16 %v1278
  %v1371 = vunpack.c.l.b16 %v1279
  %v1372 = vunpack.c.h.b16 %v1279
  %v1373 = vunpack.c.l.b16 %v1280
  %v1374 = vunpack.c.h.b16 %v1280
  %v1375 = vunpack.c.l.b16 %v1281
  %v1376 = vunpack.c.h.b16 %v1281
  %v1377 = vunpack.c.l.b16 %v1282
  %v1378 = vunpack.c.h.b16 %v1282
  %v1379 = vpack.c.b16 %v1319, %v1315
  %v1380 = vpack.c.b16 %v1320, %v1316
  %v1381 = vpack.c.b16 %v1321, %v1317
  %v1382 = vpack.c.b16 %v1322, %v1318
  %v1383 = vpack.c.b16 %v1327, %v1323
  %v1384 = vpack.c.b16 %v1328, %v1324
  %v1385 = vpack.c.b16 %v1329, %v1325
  %v1386 = vpack.c.b16 %v1330, %v1326
  %v1387 = vpack.c.b16 %v1335, %v1331
  %v1388 = vpack.c.b16 %v1336, %v1332
  %v1389 = vpack.c.b16 %v1337, %v1333
  %v1390 = vpack.c.b16 %v1338, %v1334
  %v1391 = vpack.c.b16 %v1343, %v1339
  %v1392 = vpack.c.b16 %v1344, %v1340
  %v1393 = vpack.c.b16 %v1345, %v1341
  %v1394 = vpack.c.b16 %v1346, %v1342
  %v1395 = vpack.c.b16 %v1351, %v1347
  %v1396 = vpack.c.b16 %v1352, %v1348
  %v1397 = vpack.c.b16 %v1353, %v1349
  %v1398 = vpack.c.b16 %v1354, %v1350
  %v1399 = vpack.c.b16 %v1359, %v1355
  %v1400 = vpack.c.b16 %v1360, %v1356
  %v1401 = vpack.c.b16 %v1361, %v1357
  %v1402 = vpack.c.b16 %v1362, %v1358
  %v1403 = vpack.c.b16 %v1367, %v1363
  %v1404 = vpack.c.b16 %v1368, %v1364
  %v1405 = vpack.c.b16 %v1369, %v1365
  %v1406 = vpack.c.b16 %v1370, %v1366
  %v1407 = vpack.c.b16 %v1375, %v1371
  %v1408 = vpack.c.b16 %v1376, %v1372
  %v1409 = vpack.c.b16 %v1377, %v1373
  %v1410 = vpack.c.b16 %v1378, %v1374
  %1443 = vmatpush.bf16.msra.mxu0 %v1407
  %1444 = vmatpush.bf16.msra.mxu0 %v1403
  %1445 = vmatpush.bf16.msra.mxu0 %v1399
  %1446 = vmatpush.bf16.msra.mxu0 %v1395
  %1447 = vmatpush.bf16.msra.mxu0 %v1391
  %1448 = vmatpush.bf16.msra.mxu0 %v1387
  %1449 = vmatpush.bf16.msra.mxu0 %v1383
  %1450 = vmatpush.bf16.msra.mxu0 %v1379
  %1451 = vmatmul.bf16.gmra.mxu0 %v1250
  %v1452 = vpop.f32.mrf.mxu0
  %v1453 = vadd.f32 0.0, %v1452
  %v1454 = vpop.f32.mrf.mxu0
  %1455 = vdwg.mxu0
  %1456 = vmatpush.bf16.msra.mxu0 %v1408
  %1457 = vmatpush.bf16.msra.mxu0 %v1404
  %1458 = vmatpush.bf16.msra.mxu0 %v1400
  %1459 = vmatpush.bf16.msra.mxu0 %v1396
  %1460 = vmatpush.bf16.msra.mxu0 %v1392
  %1461 = vmatpush.bf16.msra.mxu0 %v1388
  %1462 = vmatpush.bf16.msra.mxu0 %v1384
  %1463 = vmatpush.bf16.msra.mxu0 %v1380
  %1464 = vmatmul.bf16.gmra.mxu0 %v1250
  %v1465 = vpop.f32.mrf.mxu0
  %v1466 = vadd.f32 0.0, %v1465
  %v1467 = vpop.f32.mrf.mxu0
  %1468 = vdwg.mxu0
  %1469 = vmatpush.bf16.msra.mxu0 %v1409
  %1470 = vmatpush.bf16.msra.mxu0 %v1405
  %1471 = vmatpush.bf16.msra.mxu0 %v1401
  %1472 = vmatpush.bf16.msra.mxu0 %v1397
  %1473 = vmatpush.bf16.msra.mxu0 %v1393
  %1474 = vmatpush.bf16.msra.mxu0 %v1389
  %1475 = vmatpush.bf16.msra.mxu0 %v1385
  %1476 = vmatpush.bf16.msra.mxu0 %v1381
  %1477 = vmatmul.bf16.gmra.mxu0 %v1250
  %v1478 = vpop.f32.mrf.mxu0
  %v1479 = vadd.f32 0.0, %v1478
  %v1480 = vpop.f32.mrf.mxu0
  %1481 = vdwg.mxu0
  %1482 = vmatpush.bf16.msra.mxu0 %v1410
  %1483 = vmatpush.bf16.msra.mxu0 %v1406
  %1484 = vmatpush.bf16.msra.mxu0 %v1402
  %1485 = vmatpush.bf16.msra.mxu0 %v1398
  %1486 = vmatpush.bf16.msra.mxu0 %v1394
  %1487 = vmatpush.bf16.msra.mxu0 %v1390
  %1488 = vmatpush.bf16.msra.mxu0 %v1386
  %1489 = vmatpush.bf16.msra.mxu0 %v1382
  %1490 = vmatmul.bf16.gmra.mxu0 %v1250
  %v1491 = vpop.f32.mrf.mxu0
  %v1492 = vadd.f32 0.0, %v1491
  %v1493 = vpop.f32.mrf.mxu0
  %1494 = vdwg.mxu0
  %v1495 = vadd.f32 %v1246, %v1453
  %v1496 = vadd.f32 %v1247, %v1466
  %v1497 = vadd.f32 %v1248, %v1479
  %v1498 = vadd.f32 %v1249, %v1492
  %v1499 = vxor.u32 %v1495, 2147483648
  %v1500 = vmul.f32 %v1499, 1.442695
  %v1501 = vpow.pop %v1500
  %v1502 = vadd.f32 %v1501, 1.0
  %v1503 = vrcp.pop %v1502
  %v1504 = vmul.f32 %v1502, %v1503
  %v1505 = vsub.f32 1.0, %v1504
  %v1506 = vmul.f32 %v1503, %v1505
  %v1507 = vadd.f32 %v1503, %v1506
  %vm1508 = vweird.f32 %v1502
  %vm1509 = vweird.f32 %v1503
  %vm1510 = vmor %vm1508, %vm1509
  %v1511 = vsel %vm1510, %v1503, %v1507
  %v1512 = vand.u32 2147483647, %v1502
  %vm1513 = vcmp.eq.f32.partialorder %v1512, 8.507059e+37
  %v1514 = vand.u32 %v1502, 2147483648
  %v1515 = vor.u32 1.1754944e-38, %v1514
  %v1516 = vsel %vm1513, %v1515, %v1511
  %v1517 = vmul.f32 1.0, %v1516
  %v1518 = vxor.u32 %v1496, 2147483648
  %v1519 = vmul.f32 %v1518, 1.442695
  %v1520 = vpow.pop %v1519
  %v1521 = vadd.f32 %v1520, 1.0
  %v1522 = vrcp.pop %v1521
  %v1523 = vmul.f32 %v1521, %v1522
  %v1524 = vsub.f32 1.0, %v1523
  %v1525 = vmul.f32 %v1522, %v1524
  %v1526 = vadd.f32 %v1522, %v1525
  %vm1527 = vweird.f32 %v1521
  %vm1528 = vweird.f32 %v1522
  %vm1529 = vmor %vm1527, %vm1528
  %v1530 = vsel %vm1529, %v1522, %v1526
  %v1531 = vand.u32 2147483647, %v1521
  %vm1532 = vcmp.eq.f32.partialorder %v1531, 8.507059e+37
  %v1533 = vand.u32 %v1521, 2147483648
  %v1534 = vor.u32 1.1754944e-38, %v1533
  %v1535 = vsel %vm1532, %v1534, %v1530
  %v1536 = vmul.f32 1.0, %v1535
  %v1537 = vtanh.pop %v1497
  %v1538 = vxor.u32 %v1498, 2147483648
  %v1539 = vmul.f32 %v1538, 1.442695
  %v1540 = vpow.pop %v1539
  %v1541 = vadd.f32 %v1540, 1.0
  %v1542 = vrcp.pop %v1541
  %v1543 = vmul.f32 %v1541, %v1542
  %v1544 = vsub.f32 1.0, %v1543
  %v1545 = vmul.f32 %v1542, %v1544
  %v1546 = vadd.f32 %v1542, %v1545
  %vm1547 = vweird.f32 %v1541
  %vm1548 = vweird.f32 %v1542
  %vm1549 = vmor %vm1547, %vm1548
  %v1550 = vsel %vm1549, %v1542, %v1546
  %v1551 = vand.u32 2147483647, %v1541
  %vm1552 = vcmp.eq.f32.partialorder %v1551, 8.507059e+37
  %v1553 = vand.u32 %v1541, 2147483648
  %v1554 = vor.u32 1.1754944e-38, %v1553
  %v1555 = vsel %vm1552, %v1554, %v1550
  %v1556 = vmul.f32 1.0, %v1555
  %v1557 = vmul.f32 %v1536, %v1238
  %v1558 = vmul.f32 %v1517, %v1537
  %v1559 = vadd.f32 %v1557, %v1558
  %v1560 = vtanh.pop %v1559
  %v1561 = vmul.f32 %v1556, %v1560
  %s1562 = scalar_lea.vmem [#allocation3], 24
  %1563 = vst [vmem:[%s1562] sm:$0xff] %v1561
  %s1564 = smul.u32 4, 4
  %s1565 = smul.addr %s1564, 8
  %s1566 = scalar_lea.vmem [#allocation2], %s1565
  %v1567 = vld [vmem:[%s1566] sm:$0xff]
  %v1568 = vld [vmem:[%s1566 + $0x8] sm:$0xff]
  %v1569 = vld [vmem:[%s1566 + $0x10] sm:$0xff]
  %v1570 = vld [vmem:[%s1566 + $0x18] sm:$0xff]
  %v1571 = vpack.c.bf16 %v1561, %v1561
  %v1572 = vld [vmem:[%s3] sm:$0xff]
  %v1573 = vld [vmem:[%s3 + $0x8] sm:$0xff]
  %v1574 = vld [vmem:[%s3 + $0x10] sm:$0xff]
  %v1575 = vld [vmem:[%s3 + $0x18] sm:$0xff]
  %v1576 = vld [vmem:[%s3 + $0x20] sm:$0xff]
  %v1577 = vld [vmem:[%s3 + $0x28] sm:$0xff]
  %v1578 = vld [vmem:[%s3 + $0x30] sm:$0xff]
  %v1579 = vld [vmem:[%s3 + $0x38] sm:$0xff]
  %v1580 = vld [vmem:[%s3 + $0x40] sm:$0xff]
  %v1581 = vld [vmem:[%s3 + $0x48] sm:$0xff]
  %v1582 = vld [vmem:[%s3 + $0x50] sm:$0xff]
  %v1583 = vld [vmem:[%s3 + $0x58] sm:$0xff]
  %v1584 = vld [vmem:[%s3 + $0x60] sm:$0xff]
  %v1585 = vld [vmem:[%s3 + $0x68] sm:$0xff]
  %v1586 = vld [vmem:[%s3 + $0x70] sm:$0xff]
  %v1587 = vld [vmem:[%s3 + $0x78] sm:$0xff]
  %v1588 = vld [vmem:[%s3 + $0x80] sm:$0xff]
  %v1589 = vld [vmem:[%s3 + $0x88] sm:$0xff]
  %v1590 = vld [vmem:[%s3 + $0x90] sm:$0xff]
  %v1591 = vld [vmem:[%s3 + $0x98] sm:$0xff]
  %v1592 = vld [vmem:[%s3 + $0xa0] sm:$0xff]
  %v1593 = vld [vmem:[%s3 + $0xa8] sm:$0xff]
  %v1594 = vld [vmem:[%s3 + $0xb0] sm:$0xff]
  %v1595 = vld [vmem:[%s3 + $0xb8] sm:$0xff]
  %v1596 = vld [vmem:[%s3 + $0xc0] sm:$0xff]
  %v1597 = vld [vmem:[%s3 + $0xc8] sm:$0xff]
  %v1598 = vld [vmem:[%s3 + $0xd0] sm:$0xff]
  %v1599 = vld [vmem:[%s3 + $0xd8] sm:$0xff]
  %v1600 = vld [vmem:[%s3 + $0xe0] sm:$0xff]
  %v1601 = vld [vmem:[%s3 + $0xe8] sm:$0xff]
  %v1602 = vld [vmem:[%s3 + $0xf0] sm:$0xff]
  %v1603 = vld [vmem:[%s3 + $0xf8] sm:$0xff]
  %v1636 = vunpack.c.l.b16 %v1572
  %v1637 = vunpack.c.h.b16 %v1572
  %v1638 = vunpack.c.l.b16 %v1573
  %v1639 = vunpack.c.h.b16 %v1573
  %v1640 = vunpack.c.l.b16 %v1574
  %v1641 = vunpack.c.h.b16 %v1574
  %v1642 = vunpack.c.l.b16 %v1575
  %v1643 = vunpack.c.h.b16 %v1575
  %v1644 = vunpack.c.l.b16 %v1576
  %v1645 = vunpack.c.h.b16 %v1576
  %v1646 = vunpack.c.l.b16 %v1577
  %v1647 = vunpack.c.h.b16 %v1577
  %v1648 = vunpack.c.l.b16 %v1578
  %v1649 = vunpack.c.h.b16 %v1578
  %v1650 = vunpack.c.l.b16 %v1579
  %v1651 = vunpack.c.h.b16 %v1579
  %v1652 = vunpack.c.l.b16 %v1580
  %v1653 = vunpack.c.h.b16 %v1580
  %v1654 = vunpack.c.l.b16 %v1581
  %v1655 = vunpack.c.h.b16 %v1581
  %v1656 = vunpack.c.l.b16 %v1582
  %v1657 = vunpack.c.h.b16 %v1582
  %v1658 = vunpack.c.l.b16 %v1583
  %v1659 = vunpack.c.h.b16 %v1583
  %v1660 = vunpack.c.l.b16 %v1584
  %v1661 = vunpack.c.h.b16 %v1584
  %v1662 = vunpack.c.l.b16 %v1585
  %v1663 = vunpack.c.h.b16 %v1585
  %v1664 = vunpack.c.l.b16 %v1586
  %v1665 = vunpack.c.h.b16 %v1586
  %v1666 = vunpack.c.l.b16 %v1587
  %v1667 = vunpack.c.h.b16 %v1587
  %v1668 = vunpack.c.l.b16 %v1588
  %v1669 = vunpack.c.h.b16 %v1588
  %v1670 = vunpack.c.l.b16 %v1589
  %v1671 = vunpack.c.h.b16 %v1589
  %v1672 = vunpack.c.l.b16 %v1590
  %v1673 = vunpack.c.h.b16 %v1590
  %v1674 = vunpack.c.l.b16 %v1591
  %v1675 = vunpack.c.h.b16 %v1591
  %v1676 = vunpack.c.l.b16 %v1592
  %v1677 = vunpack.c.h.b16 %v1592
  %v1678 = vunpack.c.l.b16 %v1593
  %v1679 = vunpack.c.h.b16 %v1593
  %v1680 = vunpack.c.l.b16 %v1594
  %v1681 = vunpack.c.h.b16 %v1594
  %v1682 = vunpack.c.l.b16 %v1595
  %v1683 = vunpack.c.h.b16 %v1595
  %v1684 = vunpack.c.l.b16 %v1596
  %v1685 = vunpack.c.h.b16 %v1596
  %v1686 = vunpack.c.l.b16 %v1597
  %v1687 = vunpack.c.h.b16 %v1597
  %v1688 = vunpack.c.l.b16 %v1598
  %v1689 = vunpack.c.h.b16 %v1598
  %v1690 = vunpack.c.l.b16 %v1599
  %v1691 = vunpack.c.h.b16 %v1599
  %v1692 = vunpack.c.l.b16 %v1600
  %v1693 = vunpack.c.h.b16 %v1600
  %v1694 = vunpack.c.l.b16 %v1601
  %v1695 = vunpack.c.h.b16 %v1601
  %v1696 = vunpack.c.l.b16 %v1602
  %v1697 = vunpack.c.h.b16 %v1602
  %v1698 = vunpack.c.l.b16 %v1603
  %v1699 = vunpack.c.h.b16 %v1603
  %v1700 = vpack.c.b16 %v1640, %v1636
  %v1701 = vpack.c.b16 %v1641, %v1637
  %v1702 = vpack.c.b16 %v1642, %v1638
  %v1703 = vpack.c.b16 %v1643, %v1639
  %v1704 = vpack.c.b16 %v1648, %v1644
  %v1705 = vpack.c.b16 %v1649, %v1645
  %v1706 = vpack.c.b16 %v1650, %v1646
  %v1707 = vpack.c.b16 %v1651, %v1647
  %v1708 = vpack.c.b16 %v1656, %v1652
  %v1709 = vpack.c.b16 %v1657, %v1653
  %v1710 = vpack.c.b16 %v1658, %v1654
  %v1711 = vpack.c.b16 %v1659, %v1655
  %v1712 = vpack.c.b16 %v1664, %v1660
  %v1713 = vpack.c.b16 %v1665, %v1661
  %v1714 = vpack.c.b16 %v1666, %v1662
  %v1715 = vpack.c.b16 %v1667, %v1663
  %v1716 = vpack.c.b16 %v1672, %v1668
  %v1717 = vpack.c.b16 %v1673, %v1669
  %v1718 = vpack.c.b16 %v1674, %v1670
  %v1719 = vpack.c.b16 %v1675, %v1671
  %v1720 = vpack.c.b16 %v1680, %v1676
  %v1721 = vpack.c.b16 %v1681, %v1677
  %v1722 = vpack.c.b16 %v1682, %v1678
  %v1723 = vpack.c.b16 %v1683, %v1679
  %v1724 = vpack.c.b16 %v1688, %v1684
  %v1725 = vpack.c.b16 %v1689, %v1685
  %v1726 = vpack.c.b16 %v1690, %v1686
  %v1727 = vpack.c.b16 %v1691, %v1687
  %v1728 = vpack.c.b16 %v1696, %v1692
  %v1729 = vpack.c.b16 %v1697, %v1693
  %v1730 = vpack.c.b16 %v1698, %v1694
  %v1731 = vpack.c.b16 %v1699, %v1695
  %1764 = vmatpush.bf16.msra.mxu0 %v1728
  %1765 = vmatpush.bf16.msra.mxu0 %v1724
  %1766 = vmatpush.bf16.msra.mxu0 %v1720
  %1767 = vmatpush.bf16.msra.mxu0 %v1716
  %1768 = vmatpush.bf16.msra.mxu0 %v1712
  %1769 = vmatpush.bf16.msra.mxu0 %v1708
  %1770 = vmatpush.bf16.msra.mxu0 %v1704
  %1771 = vmatpush.bf16.msra.mxu0 %v1700
  %1772 = vmatmul.bf16.gmra.mxu0 %v1571
  %v1773 = vpop.f32.mrf.mxu0
  %v1774 = vadd.f32 0.0, %v1773
  %v1775 = vpop.f32.mrf.mxu0
  %1776 = vdwg.mxu0
  %1777 = vmatpush.bf16.msra.mxu0 %v1729
  %1778 = vmatpush.bf16.msra.mxu0 %v1725
  %1779 = vmatpush.bf16.msra.mxu0 %v1721
  %1780 = vmatpush.bf16.msra.mxu0 %v1717
  %1781 = vmatpush.bf16.msra.mxu0 %v1713
  %1782 = vmatpush.bf16.msra.mxu0 %v1709
  %1783 = vmatpush.bf16.msra.mxu0 %v1705
  %1784 = vmatpush.bf16.msra.mxu0 %v1701
  %1785 = vmatmul.bf16.gmra.mxu0 %v1571
  %v1786 = vpop.f32.mrf.mxu0
  %v1787 = vadd.f32 0.0, %v1786
  %v1788 = vpop.f32.mrf.mxu0
  %1789 = vdwg.mxu0
  %1790 = vmatpush.bf16.msra.mxu0 %v1730
  %1791 = vmatpush.bf16.msra.mxu0 %v1726
  %1792 = vmatpush.bf16.msra.mxu0 %v1722
  %1793 = vmatpush.bf16.msra.mxu0 %v1718
  %1794 = vmatpush.bf16.msra.mxu0 %v1714
  %1795 = vmatpush.bf16.msra.mxu0 %v1710
  %1796 = vmatpush.bf16.msra.mxu0 %v1706
  %1797 = vmatpush.bf16.msra.mxu0 %v1702
  %1798 = vmatmul.bf16.gmra.mxu0 %v1571
  %v1799 = vpop.f32.mrf.mxu0
  %v1800 = vadd.f32 0.0, %v1799
  %v1801 = vpop.f32.mrf.mxu0
  %1802 = vdwg.mxu0
  %1803 = vmatpush.bf16.msra.mxu0 %v1731
  %1804 = vmatpush.bf16.msra.mxu0 %v1727
  %1805 = vmatpush.bf16.msra.mxu0 %v1723
  %1806 = vmatpush.bf16.msra.mxu0 %v1719
  %1807 = vmatpush.bf16.msra.mxu0 %v1715
  %1808 = vmatpush.bf16.msra.mxu0 %v1711
  %1809 = vmatpush.bf16.msra.mxu0 %v1707
  %1810 = vmatpush.bf16.msra.mxu0 %v1703
  %1811 = vmatmul.bf16.gmra.mxu0 %v1571
  %v1812 = vpop.f32.mrf.mxu0
  %v1813 = vadd.f32 0.0, %v1812
  %v1814 = vpop.f32.mrf.mxu0
  %1815 = vdwg.mxu0
  %v1816 = vadd.f32 %v1567, %v1774
  %v1817 = vadd.f32 %v1568, %v1787
  %v1818 = vadd.f32 %v1569, %v1800
  %v1819 = vadd.f32 %v1570, %v1813
  %v1820 = vxor.u32 %v1816, 2147483648
  %v1821 = vmul.f32 %v1820, 1.442695
  %v1822 = vpow.pop %v1821
  %v1823 = vadd.f32 %v1822, 1.0
  %v1824 = vrcp.pop %v1823
  %v1825 = vmul.f32 %v1823, %v1824
  %v1826 = vsub.f32 1.0, %v1825
  %v1827 = vmul.f32 %v1824, %v1826
  %v1828 = vadd.f32 %v1824, %v1827
  %vm1829 = vweird.f32 %v1823
  %vm1830 = vweird.f32 %v1824
  %vm1831 = vmor %vm1829, %vm1830
  %v1832 = vsel %vm1831, %v1824, %v1828
  %v1833 = vand.u32 2147483647, %v1823
  %vm1834 = vcmp.eq.f32.partialorder %v1833, 8.507059e+37
  %v1835 = vand.u32 %v1823, 2147483648
  %v1836 = vor.u32 1.1754944e-38, %v1835
  %v1837 = vsel %vm1834, %v1836, %v1832
  %v1838 = vmul.f32 1.0, %v1837
  %v1839 = vxor.u32 %v1817, 2147483648
  %v1840 = vmul.f32 %v1839, 1.442695
  %v1841 = vpow.pop %v1840
  %v1842 = vadd.f32 %v1841, 1.0
  %v1843 = vrcp.pop %v1842
  %v1844 = vmul.f32 %v1842, %v1843
  %v1845 = vsub.f32 1.0, %v1844
  %v1846 = vmul.f32 %v1843, %v1845
  %v1847 = vadd.f32 %v1843, %v1846
  %vm1848 = vweird.f32 %v1842
  %vm1849 = vweird.f32 %v1843
  %vm1850 = vmor %vm1848, %vm1849
  %v1851 = vsel %vm1850, %v1843, %v1847
  %v1852 = vand.u32 2147483647, %v1842
  %vm1853 = vcmp.eq.f32.partialorder %v1852, 8.507059e+37
  %v1854 = vand.u32 %v1842, 2147483648
  %v1855 = vor.u32 1.1754944e-38, %v1854
  %v1856 = vsel %vm1853, %v1855, %v1851
  %v1857 = vmul.f32 1.0, %v1856
  %v1858 = vtanh.pop %v1818
  %v1859 = vxor.u32 %v1819, 2147483648
  %v1860 = vmul.f32 %v1859, 1.442695
  %v1861 = vpow.pop %v1860
  %v1862 = vadd.f32 %v1861, 1.0
  %v1863 = vrcp.pop %v1862
  %v1864 = vmul.f32 %v1862, %v1863
  %v1865 = vsub.f32 1.0, %v1864
  %v1866 = vmul.f32 %v1863, %v1865
  %v1867 = vadd.f32 %v1863, %v1866
  %vm1868 = vweird.f32 %v1862
  %vm1869 = vweird.f32 %v1863
  %vm1870 = vmor %vm1868, %vm1869
  %v1871 = vsel %vm1870, %v1863, %v1867
  %v1872 = vand.u32 2147483647, %v1862
  %vm1873 = vcmp.eq.f32.partialorder %v1872, 8.507059e+37
  %v1874 = vand.u32 %v1862, 2147483648
  %v1875 = vor.u32 1.1754944e-38, %v1874
  %v1876 = vsel %vm1873, %v1875, %v1871
  %v1877 = vmul.f32 1.0, %v1876
  %v1878 = vmul.f32 %v1857, %v1559
  %v1879 = vmul.f32 %v1838, %v1858
  %v1880 = vadd.f32 %v1878, %v1879
  %v1881 = vtanh.pop %v1880
  %v1882 = vmul.f32 %v1877, %v1881
  %s1883 = scalar_lea.vmem [#allocation3], 32
  %1884 = vst [vmem:[%s1883] sm:$0xff] %v1882
  %s1885 = smul.u32 5, 4
  %s1886 = smul.addr %s1885, 8
  %s1887 = scalar_lea.vmem [#allocation2], %s1886
  %v1888 = vld [vmem:[%s1887] sm:$0xff]
  %v1889 = vld [vmem:[%s1887 + $0x8] sm:$0xff]
  %v1890 = vld [vmem:[%s1887 + $0x10] sm:$0xff]
  %v1891 = vld [vmem:[%s1887 + $0x18] sm:$0xff]
  %v1892 = vpack.c.bf16 %v1882, %v1882
  %v1893 = vld [vmem:[%s3] sm:$0xff]
  %v1894 = vld [vmem:[%s3 + $0x8] sm:$0xff]
  %v1895 = vld [vmem:[%s3 + $0x10] sm:$0xff]
  %v1896 = vld [vmem:[%s3 + $0x18] sm:$0xff]
  %v1897 = vld [vmem:[%s3 + $0x20] sm:$0xff]
  %v1898 = vld [vmem:[%s3 + $0x28] sm:$0xff]
  %v1899 = vld [vmem:[%s3 + $0x30] sm:$0xff]
  %v1900 = vld [vmem:[%s3 + $0x38] sm:$0xff]
  %v1901 = vld [vmem:[%s3 + $0x40] sm:$0xff]
  %v1902 = vld [vmem:[%s3 + $0x48] sm:$0xff]
  %v1903 = vld [vmem:[%s3 + $0x50] sm:$0xff]
  %v1904 = vld [vmem:[%s3 + $0x58] sm:$0xff]
  %v1905 = vld [vmem:[%s3 + $0x60] sm:$0xff]
  %v1906 = vld [vmem:[%s3 + $0x68] sm:$0xff]
  %v1907 = vld [vmem:[%s3 + $0x70] sm:$0xff]
  %v1908 = vld [vmem:[%s3 + $0x78] sm:$0xff]
  %v1909 = vld [vmem:[%s3 + $0x80] sm:$0xff]
  %v1910 = vld [vmem:[%s3 + $0x88] sm:$0xff]
  %v1911 = vld [vmem:[%s3 + $0x90] sm:$0xff]
  %v1912 = vld [vmem:[%s3 + $0x98] sm:$0xff]
  %v1913 = vld [vmem:[%s3 + $0xa0] sm:$0xff]
  %v1914 = vld [vmem:[%s3 + $0xa8] sm:$0xff]
  %v1915 = vld [vmem:[%s3 + $0xb0] sm:$0xff]
  %v1916 = vld [vmem:[%s3 + $0xb8] sm:$0xff]
  %v1917 = vld [vmem:[%s3 + $0xc0] sm:$0xff]
  %v1918 = vld [vmem:[%s3 + $0xc8] sm:$0xff]
  %v1919 = vld [vmem:[%s3 + $0xd0] sm:$0xff]
  %v1920 = vld [vmem:[%s3 + $0xd8] sm:$0xff]
  %v1921 = vld [vmem:[%s3 + $0xe0] sm:$0xff]
  %v1922 = vld [vmem:[%s3 + $0xe8] sm:$0xff]
  %v1923 = vld [vmem:[%s3 + $0xf0] sm:$0xff]
  %v1924 = vld [vmem:[%s3 + $0xf8] sm:$0xff]
  %v1957 = vunpack.c.l.b16 %v1893
  %v1958 = vunpack.c.h.b16 %v1893
  %v1959 = vunpack.c.l.b16 %v1894
  %v1960 = vunpack.c.h.b16 %v1894
  %v1961 = vunpack.c.l.b16 %v1895
  %v1962 = vunpack.c.h.b16 %v1895
  %v1963 = vunpack.c.l.b16 %v1896
  %v1964 = vunpack.c.h.b16 %v1896
  %v1965 = vunpack.c.l.b16 %v1897
  %v1966 = vunpack.c.h.b16 %v1897
  %v1967 = vunpack.c.l.b16 %v1898
  %v1968 = vunpack.c.h.b16 %v1898
  %v1969 = vunpack.c.l.b16 %v1899
  %v1970 = vunpack.c.h.b16 %v1899
  %v1971 = vunpack.c.l.b16 %v1900
  %v1972 = vunpack.c.h.b16 %v1900
  %v1973 = vunpack.c.l.b16 %v1901
  %v1974 = vunpack.c.h.b16 %v1901
  %v1975 = vunpack.c.l.b16 %v1902
  %v1976 = vunpack.c.h.b16 %v1902
  %v1977 = vunpack.c.l.b16 %v1903
  %v1978 = vunpack.c.h.b16 %v1903
  %v1979 = vunpack.c.l.b16 %v1904
  %v1980 = vunpack.c.h.b16 %v1904
  %v1981 = vunpack.c.l.b16 %v1905
  %v1982 = vunpack.c.h.b16 %v1905
  %v1983 = vunpack.c.l.b16 %v1906
  %v1984 = vunpack.c.h.b16 %v1906
  %v1985 = vunpack.c.l.b16 %v1907
  %v1986 = vunpack.c.h.b16 %v1907
  %v1987 = vunpack.c.l.b16 %v1908
  %v1988 = vunpack.c.h.b16 %v1908
  %v1989 = vunpack.c.l.b16 %v1909
  %v1990 = vunpack.c.h.b16 %v1909
  %v1991 = vunpack.c.l.b16 %v1910
  %v1992 = vunpack.c.h.b16 %v1910
  %v1993 = vunpack.c.l.b16 %v1911
  %v1994 = vunpack.c.h.b16 %v1911
  %v1995 = vunpack.c.l.b16 %v1912
  %v1996 = vunpack.c.h.b16 %v1912
  %v1997 = vunpack.c.l.b16 %v1913
  %v1998 = vunpack.c.h.b16 %v1913
  %v1999 = vunpack.c.l.b16 %v1914
  %v2000 = vunpack.c.h.b16 %v1914
  %v2001 = vunpack.c.l.b16 %v1915
  %v2002 = vunpack.c.h.b16 %v1915
  %v2003 = vunpack.c.l.b16 %v1916
  %v2004 = vunpack.c.h.b16 %v1916
  %v2005 = vunpack.c.l.b16 %v1917
  %v2006 = vunpack.c.h.b16 %v1917
  %v2007 = vunpack.c.l.b16 %v1918
  %v2008 = vunpack.c.h.b16 %v1918
  %v2009 = vunpack.c.l.b16 %v1919
  %v2010 = vunpack.c.h.b16 %v1919
  %v2011 = vunpack.c.l.b16 %v1920
  %v2012 = vunpack.c.h.b16 %v1920
  %v2013 = vunpack.c.l.b16 %v1921
  %v2014 = vunpack.c.h.b16 %v1921
  %v2015 = vunpack.c.l.b16 %v1922
  %v2016 = vunpack.c.h.b16 %v1922
  %v2017 = vunpack.c.l.b16 %v1923
  %v2018 = vunpack.c.h.b16 %v1923
  %v2019 = vunpack.c.l.b16 %v1924
  %v2020 = vunpack.c.h.b16 %v1924
  %v2021 = vpack.c.b16 %v1961, %v1957
  %v2022 = vpack.c.b16 %v1962, %v1958
  %v2023 = vpack.c.b16 %v1963, %v1959
  %v2024 = vpack.c.b16 %v1964, %v1960
  %v2025 = vpack.c.b16 %v1969, %v1965
  %v2026 = vpack.c.b16 %v1970, %v1966
  %v2027 = vpack.c.b16 %v1971, %v1967
  %v2028 = vpack.c.b16 %v1972, %v1968
  %v2029 = vpack.c.b16 %v1977, %v1973
  %v2030 = vpack.c.b16 %v1978, %v1974
  %v2031 = vpack.c.b16 %v1979, %v1975
  %v2032 = vpack.c.b16 %v1980, %v1976
  %v2033 = vpack.c.b16 %v1985, %v1981
  %v2034 = vpack.c.b16 %v1986, %v1982
  %v2035 = vpack.c.b16 %v1987, %v1983
  %v2036 = vpack.c.b16 %v1988, %v1984
  %v2037 = vpack.c.b16 %v1993, %v1989
  %v2038 = vpack.c.b16 %v1994, %v1990
  %v2039 = vpack.c.b16 %v1995, %v1991
  %v2040 = vpack.c.b16 %v1996, %v1992
  %v2041 = vpack.c.b16 %v2001, %v1997
  %v2042 = vpack.c.b16 %v2002, %v1998
  %v2043 = vpack.c.b16 %v2003, %v1999
  %v2044 = vpack.c.b16 %v2004, %v2000
  %v2045 = vpack.c.b16 %v2009, %v2005
  %v2046 = vpack.c.b16 %v2010, %v2006
  %v2047 = vpack.c.b16 %v2011, %v2007
  %v2048 = vpack.c.b16 %v2012, %v2008
  %v2049 = vpack.c.b16 %v2017, %v2013
  %v2050 = vpack.c.b16 %v2018, %v2014
  %v2051 = vpack.c.b16 %v2019, %v2015
  %v2052 = vpack.c.b16 %v2020, %v2016
  %2085 = vmatpush.bf16.msra.mxu0 %v2049
  %2086 = vmatpush.bf16.msra.mxu0 %v2045
  %2087 = vmatpush.bf16.msra.mxu0 %v2041
  %2088 = vmatpush.bf16.msra.mxu0 %v2037
  %2089 = vmatpush.bf16.msra.mxu0 %v2033
  %2090 = vmatpush.bf16.msra.mxu0 %v2029
  %2091 = vmatpush.bf16.msra.mxu0 %v2025
  %2092 = vmatpush.bf16.msra.mxu0 %v2021
  %2093 = vmatmul.bf16.gmra.mxu0 %v1892
  %v2094 = vpop.f32.mrf.mxu0
  %v2095 = vadd.f32 0.0, %v2094
  %v2096 = vpop.f32.mrf.mxu0
  %2097 = vdwg.mxu0
  %2098 = vmatpush.bf16.msra.mxu0 %v2050
  %2099 = vmatpush.bf16.msra.mxu0 %v2046
  %2100 = vmatpush.bf16.msra.mxu0 %v2042
  %2101 = vmatpush.bf16.msra.mxu0 %v2038
  %2102 = vmatpush.bf16.msra.mxu0 %v2034
  %2103 = vmatpush.bf16.msra.mxu0 %v2030
  %2104 = vmatpush.bf16.msra.mxu0 %v2026
  %2105 = vmatpush.bf16.msra.mxu0 %v2022
  %2106 = vmatmul.bf16.gmra.mxu0 %v1892
  %v2107 = vpop.f32.mrf.mxu0
  %v2108 = vadd.f32 0.0, %v2107
  %v2109 = vpop.f32.mrf.mxu0
  %2110 = vdwg.mxu0
  %2111 = vmatpush.bf16.msra.mxu0 %v2051
  %2112 = vmatpush.bf16.msra.mxu0 %v2047
  %2113 = vmatpush.bf16.msra.mxu0 %v2043
  %2114 = vmatpush.bf16.msra.mxu0 %v2039
  %2115 = vmatpush.bf16.msra.mxu0 %v2035
  %2116 = vmatpush.bf16.msra.mxu0 %v2031
  %2117 = vmatpush.bf16.msra.mxu0 %v2027
  %2118 = vmatpush.bf16.msra.mxu0 %v2023
  %2119 = vmatmul.bf16.gmra.mxu0 %v1892
  %v2120 = vpop.f32.mrf.mxu0
  %v2121 = vadd.f32 0.0, %v2120
  %v2122 = vpop.f32.mrf.mxu0
  %2123 = vdwg.mxu0
  %2124 = vmatpush.bf16.msra.mxu0 %v2052
  %2125 = vmatpush.bf16.msra.mxu0 %v2048
  %2126 = vmatpush.bf16.msra.mxu0 %v2044
  %2127 = vmatpush.bf16.msra.mxu0 %v2040
  %2128 = vmatpush.bf16.msra.mxu0 %v2036
  %2129 = vmatpush.bf16.msra.mxu0 %v2032
  %2130 = vmatpush.bf16.msra.mxu0 %v2028
  %2131 = vmatpush.bf16.msra.mxu0 %v2024
  %2132 = vmatmul.bf16.gmra.mxu0 %v1892
  %v2133 = vpop.f32.mrf.mxu0
  %v2134 = vadd.f32 0.0, %v2133
  %v2135 = vpop.f32.mrf.mxu0
  %2136 = vdwg.mxu0
  %v2137 = vadd.f32 %v1888, %v2095
  %v2138 = vadd.f32 %v1889, %v2108
  %v2139 = vadd.f32 %v1890, %v2121
  %v2140 = vadd.f32 %v1891, %v2134
  %v2141 = vxor.u32 %v2137, 2147483648
  %v2142 = vmul.f32 %v2141, 1.442695
  %v2143 = vpow.pop %v2142
  %v2144 = vadd.f32 %v2143, 1.0
  %v2145 = vrcp.pop %v2144
  %v2146 = vmul.f32 %v2144, %v2145
  %v2147 = vsub.f32 1.0, %v2146
  %v2148 = vmul.f32 %v2145, %v2147
  %v2149 = vadd.f32 %v2145, %v2148
  %vm2150 = vweird.f32 %v2144
  %vm2151 = vweird.f32 %v2145
  %vm2152 = vmor %vm2150, %vm2151
  %v2153 = vsel %vm2152, %v2145, %v2149
  %v2154 = vand.u32 2147483647, %v2144
  %vm2155 = vcmp.eq.f32.partialorder %v2154, 8.507059e+37
  %v2156 = vand.u32 %v2144, 2147483648
  %v2157 = vor.u32 1.1754944e-38, %v2156
  %v2158 = vsel %vm2155, %v2157, %v2153
  %v2159 = vmul.f32 1.0, %v2158
  %v2160 = vxor.u32 %v2138, 2147483648
  %v2161 = vmul.f32 %v2160, 1.442695
  %v2162 = vpow.pop %v2161
  %v2163 = vadd.f32 %v2162, 1.0
  %v2164 = vrcp.pop %v2163
  %v2165 = vmul.f32 %v2163, %v2164
  %v2166 = vsub.f32 1.0, %v2165
  %v2167 = vmul.f32 %v2164, %v2166
  %v2168 = vadd.f32 %v2164, %v2167
  %vm2169 = vweird.f32 %v2163
  %vm2170 = vweird.f32 %v2164
  %vm2171 = vmor %vm2169, %vm2170
  %v2172 = vsel %vm2171, %v2164, %v2168
  %v2173 = vand.u32 2147483647, %v2163
  %vm2174 = vcmp.eq.f32.partialorder %v2173, 8.507059e+37
  %v2175 = vand.u32 %v2163, 2147483648
  %v2176 = vor.u32 1.1754944e-38, %v2175
  %v2177 = vsel %vm2174, %v2176, %v2172
  %v2178 = vmul.f32 1.0, %v2177
  %v2179 = vtanh.pop %v2139
  %v2180 = vxor.u32 %v2140, 2147483648
  %v2181 = vmul.f32 %v2180, 1.442695
  %v2182 = vpow.pop %v2181
  %v2183 = vadd.f32 %v2182, 1.0
  %v2184 = vrcp.pop %v2183
  %v2185 = vmul.f32 %v2183, %v2184
  %v2186 = vsub.f32 1.0, %v2185
  %v2187 = vmul.f32 %v2184, %v2186
  %v2188 = vadd.f32 %v2184, %v2187
  %vm2189 = vweird.f32 %v2183
  %vm2190 = vweird.f32 %v2184
  %vm2191 = vmor %vm2189, %vm2190
  %v2192 = vsel %vm2191, %v2184, %v2188
  %v2193 = vand.u32 2147483647, %v2183
  %vm2194 = vcmp.eq.f32.partialorder %v2193, 8.507059e+37
  %v2195 = vand.u32 %v2183, 2147483648
  %v2196 = vor.u32 1.1754944e-38, %v2195
  %v2197 = vsel %vm2194, %v2196, %v2192
  %v2198 = vmul.f32 1.0, %v2197
  %v2199 = vmul.f32 %v2178, %v1880
  %v2200 = vmul.f32 %v2159, %v2179
  %v2201 = vadd.f32 %v2199, %v2200
  %v2202 = vtanh.pop %v2201
  %v2203 = vmul.f32 %v2198, %v2202
  %s2204 = scalar_lea.vmem [#allocation3], 40
  %2205 = vst [vmem:[%s2204] sm:$0xff] %v2203
  %s2206 = smul.u32 6, 4
  %s2207 = smul.addr %s2206, 8
  %s2208 = scalar_lea.vmem [#allocation2], %s2207
  %v2209 = vld [vmem:[%s2208] sm:$0xff]
  %v2210 = vld [vmem:[%s2208 + $0x8] sm:$0xff]
  %v2211 = vld [vmem:[%s2208 + $0x10] sm:$0xff]
  %v2212 = vld [vmem:[%s2208 + $0x18] sm:$0xff]
  %v2213 = vpack.c.bf16 %v2203, %v2203
  %v2214 = vld [vmem:[%s3] sm:$0xff]
  %v2215 = vld [vmem:[%s3 + $0x8] sm:$0xff]
  %v2216 = vld [vmem:[%s3 + $0x10] sm:$0xff]
  %v2217 = vld [vmem:[%s3 + $0x18] sm:$0xff]
  %v2218 = vld [vmem:[%s3 + $0x20] sm:$0xff]
  %v2219 = vld [vmem:[%s3 + $0x28] sm:$0xff]
  %v2220 = vld [vmem:[%s3 + $0x30] sm:$0xff]
  %v2221 = vld [vmem:[%s3 + $0x38] sm:$0xff]
  %v2222 = vld [vmem:[%s3 + $0x40] sm:$0xff]
  %v2223 = vld [vmem:[%s3 + $0x48] sm:$0xff]
  %v2224 = vld [vmem:[%s3 + $0x50] sm:$0xff]
  %v2225 = vld [vmem:[%s3 + $0x58] sm:$0xff]
  %v2226 = vld [vmem:[%s3 + $0x60] sm:$0xff]
  %v2227 = vld [vmem:[%s3 + $0x68] sm:$0xff]
  %v2228 = vld [vmem:[%s3 + $0x70] sm:$0xff]
  %v2229 = vld [vmem:[%s3 + $0x78] sm:$0xff]
  %v2230 = vld [vmem:[%s3 + $0x80] sm:$0xff]
  %v2231 = vld [vmem:[%s3 + $0x88] sm:$0xff]
  %v2232 = vld [vmem:[%s3 + $0x90] sm:$0xff]
  %v2233 = vld [vmem:[%s3 + $0x98] sm:$0xff]
  %v2234 = vld [vmem:[%s3 + $0xa0] sm:$0xff]
  %v2235 = vld [vmem:[%s3 + $0xa8] sm:$0xff]
  %v2236 = vld [vmem:[%s3 + $0xb0] sm:$0xff]
  %v2237 = vld [vmem:[%s3 + $0xb8] sm:$0xff]
  %v2238 = vld [vmem:[%s3 + $0xc0] sm:$0xff]
  %v2239 = vld [vmem:[%s3 + $0xc8] sm:$0xff]
  %v2240 = vld [vmem:[%s3 + $0xd0] sm:$0xff]
  %v2241 = vld [vmem:[%s3 + $0xd8] sm:$0xff]
  %v2242 = vld [vmem:[%s3 + $0xe0] sm:$0xff]
  %v2243 = vld [vmem:[%s3 + $0xe8] sm:$0xff]
  %v2244 = vld [vmem:[%s3 + $0xf0] sm:$0xff]
  %v2245 = vld [vmem:[%s3 + $0xf8] sm:$0xff]
  %v2278 = vunpack.c.l.b16 %v2214
  %v2279 = vunpack.c.h.b16 %v2214
  %v2280 = vunpack.c.l.b16 %v2215
  %v2281 = vunpack.c.h.b16 %v2215
  %v2282 = vunpack.c.l.b16 %v2216
  %v2283 = vunpack.c.h.b16 %v2216
  %v2284 = vunpack.c.l.b16 %v2217
  %v2285 = vunpack.c.h.b16 %v2217
  %v2286 = vunpack.c.l.b16 %v2218
  %v2287 = vunpack.c.h.b16 %v2218
  %v2288 = vunpack.c.l.b16 %v2219
  %v2289 = vunpack.c.h.b16 %v2219
  %v2290 = vunpack.c.l.b16 %v2220
  %v2291 = vunpack.c.h.b16 %v2220
  %v2292 = vunpack.c.l.b16 %v2221
  %v2293 = vunpack.c.h.b16 %v2221
  %v2294 = vunpack.c.l.b16 %v2222
  %v2295 = vunpack.c.h.b16 %v2222
  %v2296 = vunpack.c.l.b16 %v2223
  %v2297 = vunpack.c.h.b16 %v2223
  %v2298 = vunpack.c.l.b16 %v2224
  %v2299 = vunpack.c.h.b16 %v2224
  %v2300 = vunpack.c.l.b16 %v2225
  %v2301 = vunpack.c.h.b16 %v2225
  %v2302 = vunpack.c.l.b16 %v2226
  %v2303 = vunpack.c.h.b16 %v2226
  %v2304 = vunpack.c.l.b16 %v2227
  %v2305 = vunpack.c.h.b16 %v2227
  %v2306 = vunpack.c.l.b16 %v2228
  %v2307 = vunpack.c.h.b16 %v2228
  %v2308 = vunpack.c.l.b16 %v2229
  %v2309 = vunpack.c.h.b16 %v2229
  %v2310 = vunpack.c.l.b16 %v2230
  %v2311 = vunpack.c.h.b16 %v2230
  %v2312 = vunpack.c.l.b16 %v2231
  %v2313 = vunpack.c.h.b16 %v2231
  %v2314 = vunpack.c.l.b16 %v2232
  %v2315 = vunpack.c.h.b16 %v2232
  %v2316 = vunpack.c.l.b16 %v2233
  %v2317 = vunpack.c.h.b16 %v2233
  %v2318 = vunpack.c.l.b16 %v2234
  %v2319 = vunpack.c.h.b16 %v2234
  %v2320 = vunpack.c.l.b16 %v2235
  %v2321 = vunpack.c.h.b16 %v2235
  %v2322 = vunpack.c.l.b16 %v2236
  %v2323 = vunpack.c.h.b16 %v2236
  %v2324 = vunpack.c.l.b16 %v2237
  %v2325 = vunpack.c.h.b16 %v2237
  %v2326 = vunpack.c.l.b16 %v2238
  %v2327 = vunpack.c.h.b16 %v2238
  %v2328 = vunpack.c.l.b16 %v2239
  %v2329 = vunpack.c.h.b16 %v2239
  %v2330 = vunpack.c.l.b16 %v2240
  %v2331 = vunpack.c.h.b16 %v2240
  %v2332 = vunpack.c.l.b16 %v2241
  %v2333 = vunpack.c.h.b16 %v2241
  %v2334 = vunpack.c.l.b16 %v2242
  %v2335 = vunpack.c.h.b16 %v2242
  %v2336 = vunpack.c.l.b16 %v2243
  %v2337 = vunpack.c.h.b16 %v2243
  %v2338 = vunpack.c.l.b16 %v2244
  %v2339 = vunpack.c.h.b16 %v2244
  %v2340 = vunpack.c.l.b16 %v2245
  %v2341 = vunpack.c.h.b16 %v2245
  %v2342 = vpack.c.b16 %v2282, %v2278
  %v2343 = vpack.c.b16 %v2283, %v2279
  %v2344 = vpack.c.b16 %v2284, %v2280
  %v2345 = vpack.c.b16 %v2285, %v2281
  %v2346 = vpack.c.b16 %v2290, %v2286
  %v2347 = vpack.c.b16 %v2291, %v2287
  %v2348 = vpack.c.b16 %v2292, %v2288
  %v2349 = vpack.c.b16 %v2293, %v2289
  %v2350 = vpack.c.b16 %v2298, %v2294
  %v2351 = vpack.c.b16 %v2299, %v2295
  %v2352 = vpack.c.b16 %v2300, %v2296
  %v2353 = vpack.c.b16 %v2301, %v2297
  %v2354 = vpack.c.b16 %v2306, %v2302
  %v2355 = vpack.c.b16 %v2307, %v2303
  %v2356 = vpack.c.b16 %v2308, %v2304
  %v2357 = vpack.c.b16 %v2309, %v2305
  %v2358 = vpack.c.b16 %v2314, %v2310
  %v2359 = vpack.c.b16 %v2315, %v2311
  %v2360 = vpack.c.b16 %v2316, %v2312
  %v2361 = vpack.c.b16 %v2317, %v2313
  %v2362 = vpack.c.b16 %v2322, %v2318
  %v2363 = vpack.c.b16 %v2323, %v2319
  %v2364 = vpack.c.b16 %v2324, %v2320
  %v2365 = vpack.c.b16 %v2325, %v2321
  %v2366 = vpack.c.b16 %v2330, %v2326
  %v2367 = vpack.c.b16 %v2331, %v2327
  %v2368 = vpack.c.b16 %v2332, %v2328
  %v2369 = vpack.c.b16 %v2333, %v2329
  %v2370 = vpack.c.b16 %v2338, %v2334
  %v2371 = vpack.c.b16 %v2339, %v2335
  %v2372 = vpack.c.b16 %v2340, %v2336
  %v2373 = vpack.c.b16 %v2341, %v2337
  %2406 = vmatpush.bf16.msra.mxu0 %v2370
  %2407 = vmatpush.bf16.msra.mxu0 %v2366
  %2408 = vmatpush.bf16.msra.mxu0 %v2362
  %2409 = vmatpush.bf16.msra.mxu0 %v2358
  %2410 = vmatpush.bf16.msra.mxu0 %v2354
  %2411 = vmatpush.bf16.msra.mxu0 %v2350
  %2412 = vmatpush.bf16.msra.mxu0 %v2346
  %2413 = vmatpush.bf16.msra.mxu0 %v2342
  %2414 = vmatmul.bf16.gmra.mxu0 %v2213
  %v2415 = vpop.f32.mrf.mxu0
  %v2416 = vadd.f32 0.0, %v2415
  %v2417 = vpop.f32.mrf.mxu0
  %2418 = vdwg.mxu0
  %2419 = vmatpush.bf16.msra.mxu0 %v2371
  %2420 = vmatpush.bf16.msra.mxu0 %v2367
  %2421 = vmatpush.bf16.msra.mxu0 %v2363
  %2422 = vmatpush.bf16.msra.mxu0 %v2359
  %2423 = vmatpush.bf16.msra.mxu0 %v2355
  %2424 = vmatpush.bf16.msra.mxu0 %v2351
  %2425 = vmatpush.bf16.msra.mxu0 %v2347
  %2426 = vmatpush.bf16.msra.mxu0 %v2343
  %2427 = vmatmul.bf16.gmra.mxu0 %v2213
  %v2428 = vpop.f32.mrf.mxu0
  %v2429 = vadd.f32 0.0, %v2428
  %v2430 = vpop.f32.mrf.mxu0
  %2431 = vdwg.mxu0
  %2432 = vmatpush.bf16.msra.mxu0 %v2372
  %2433 = vmatpush.bf16.msra.mxu0 %v2368
  %2434 = vmatpush.bf16.msra.mxu0 %v2364
  %2435 = vmatpush.bf16.msra.mxu0 %v2360
  %2436 = vmatpush.bf16.msra.mxu0 %v2356
  %2437 = vmatpush.bf16.msra.mxu0 %v2352
  %2438 = vmatpush.bf16.msra.mxu0 %v2348
  %2439 = vmatpush.bf16.msra.mxu0 %v2344
  %2440 = vmatmul.bf16.gmra.mxu0 %v2213
  %v2441 = vpop.f32.mrf.mxu0
  %v2442 = vadd.f32 0.0, %v2441
  %v2443 = vpop.f32.mrf.mxu0
  %2444 = vdwg.mxu0
  %2445 = vmatpush.bf16.msra.mxu0 %v2373
  %2446 = vmatpush.bf16.msra.mxu0 %v2369
  %2447 = vmatpush.bf16.msra.mxu0 %v2365
  %2448 = vmatpush.bf16.msra.mxu0 %v2361
  %2449 = vmatpush.bf16.msra.mxu0 %v2357
  %2450 = vmatpush.bf16.msra.mxu0 %v2353
  %2451 = vmatpush.bf16.msra.mxu0 %v2349
  %2452 = vmatpush.bf16.msra.mxu0 %v2345
  %2453 = vmatmul.bf16.gmra.mxu0 %v2213
  %v2454 = vpop.f32.mrf.mxu0
  %v2455 = vadd.f32 0.0, %v2454
  %v2456 = vpop.f32.mrf.mxu0
  %2457 = vdwg.mxu0
  %v2458 = vadd.f32 %v2209, %v2416
  %v2459 = vadd.f32 %v2210, %v2429
  %v2460 = vadd.f32 %v2211, %v2442
  %v2461 = vadd.f32 %v2212, %v2455
  %v2462 = vxor.u32 %v2458, 2147483648
  %v2463 = vmul.f32 %v2462, 1.442695
  %v2464 = vpow.pop %v2463
  %v2465 = vadd.f32 %v2464, 1.0
  %v2466 = vrcp.pop %v2465
  %v2467 = vmul.f32 %v2465, %v2466
  %v2468 = vsub.f32 1.0, %v2467
  %v2469 = vmul.f32 %v2466, %v2468
  %v2470 = vadd.f32 %v2466, %v2469
  %vm2471 = vweird.f32 %v2465
  %vm2472 = vweird.f32 %v2466
  %vm2473 = vmor %vm2471, %vm2472
  %v2474 = vsel %vm2473, %v2466, %v2470
  %v2475 = vand.u32 2147483647, %v2465
  %vm2476 = vcmp.eq.f32.partialorder %v2475, 8.507059e+37
  %v2477 = vand.u32 %v2465, 2147483648
  %v2478 = vor.u32 1.1754944e-38, %v2477
  %v2479 = vsel %vm2476, %v2478, %v2474
  %v2480 = vmul.f32 1.0, %v2479
  %v2481 = vxor.u32 %v2459, 2147483648
  %v2482 = vmul.f32 %v2481, 1.442695
  %v2483 = vpow.pop %v2482
  %v2484 = vadd.f32 %v2483, 1.0
  %v2485 = vrcp.pop %v2484
  %v2486 = vmul.f32 %v2484, %v2485
  %v2487 = vsub.f32 1.0, %v2486
  %v2488 = vmul.f32 %v2485, %v2487
  %v2489 = vadd.f32 %v2485, %v2488
  %vm2490 = vweird.f32 %v2484
  %vm2491 = vweird.f32 %v2485
  %vm2492 = vmor %vm2490, %vm2491
  %v2493 = vsel %vm2492, %v2485, %v2489
  %v2494 = vand.u32 2147483647, %v2484
  %vm2495 = vcmp.eq.f32.partialorder %v2494, 8.507059e+37
  %v2496 = vand.u32 %v2484, 2147483648
  %v2497 = vor.u32 1.1754944e-38, %v2496
  %v2498 = vsel %vm2495, %v2497, %v2493
  %v2499 = vmul.f32 1.0, %v2498
  %v2500 = vtanh.pop %v2460
  %v2501 = vxor.u32 %v2461, 2147483648
  %v2502 = vmul.f32 %v2501, 1.442695
  %v2503 = vpow.pop %v2502
  %v2504 = vadd.f32 %v2503, 1.0
  %v2505 = vrcp.pop %v2504
  %v2506 = vmul.f32 %v2504, %v2505
  %v2507 = vsub.f32 1.0, %v2506
  %v2508 = vmul.f32 %v2505, %v2507
  %v2509 = vadd.f32 %v2505, %v2508
  %vm2510 = vweird.f32 %v2504
  %vm2511 = vweird.f32 %v2505
  %vm2512 = vmor %vm2510, %vm2511
  %v2513 = vsel %vm2512, %v2505, %v2509
  %v2514 = vand.u32 2147483647, %v2504
  %vm2515 = vcmp.eq.f32.partialorder %v2514, 8.507059e+37
  %v2516 = vand.u32 %v2504, 2147483648
  %v2517 = vor.u32 1.1754944e-38, %v2516
  %v2518 = vsel %vm2515, %v2517, %v2513
  %v2519 = vmul.f32 1.0, %v2518
  %v2520 = vmul.f32 %v2499, %v2201
  %v2521 = vmul.f32 %v2480, %v2500
  %v2522 = vadd.f32 %v2520, %v2521
  %v2523 = vtanh.pop %v2522
  %v2524 = vmul.f32 %v2519, %v2523
  %s2525 = scalar_lea.vmem [#allocation3], 48
  %2526 = vst [vmem:[%s2525] sm:$0xff] %v2524
  %s2527 = smul.u32 7, 4
  %s2528 = smul.addr %s2527, 8
  %s2529 = scalar_lea.vmem [#allocation2], %s2528
  %v2530 = vld [vmem:[%s2529] sm:$0xff]
  %v2531 = vld [vmem:[%s2529 + $0x8] sm:$0xff]
  %v2532 = vld [vmem:[%s2529 + $0x10] sm:$0xff]
  %v2533 = vld [vmem:[%s2529 + $0x18] sm:$0xff]
  %v2534 = vpack.c.bf16 %v2524, %v2524
  %v2535 = vld [vmem:[%s3] sm:$0xff]
  %v2536 = vld [vmem:[%s3 + $0x8] sm:$0xff]
  %v2537 = vld [vmem:[%s3 + $0x10] sm:$0xff]
  %v2538 = vld [vmem:[%s3 + $0x18] sm:$0xff]
  %v2539 = vld [vmem:[%s3 + $0x20] sm:$0xff]
  %v2540 = vld [vmem:[%s3 + $0x28] sm:$0xff]
  %v2541 = vld [vmem:[%s3 + $0x30] sm:$0xff]
  %v2542 = vld [vmem:[%s3 + $0x38] sm:$0xff]
  %v2543 = vld [vmem:[%s3 + $0x40] sm:$0xff]
  %v2544 = vld [vmem:[%s3 + $0x48] sm:$0xff]
  %v2545 = vld [vmem:[%s3 + $0x50] sm:$0xff]
  %v2546 = vld [vmem:[%s3 + $0x58] sm:$0xff]
  %v2547 = vld [vmem:[%s3 + $0x60] sm:$0xff]
  %v2548 = vld [vmem:[%s3 + $0x68] sm:$0xff]
  %v2549 = vld [vmem:[%s3 + $0x70] sm:$0xff]
  %v2550 = vld [vmem:[%s3 + $0x78] sm:$0xff]
  %v2551 = vld [vmem:[%s3 + $0x80] sm:$0xff]
  %v2552 = vld [vmem:[%s3 + $0x88] sm:$0xff]
  %v2553 = vld [vmem:[%s3 + $0x90] sm:$0xff]
  %v2554 = vld [vmem:[%s3 + $0x98] sm:$0xff]
  %v2555 = vld [vmem:[%s3 + $0xa0] sm:$0xff]
  %v2556 = vld [vmem:[%s3 + $0xa8] sm:$0xff]
  %v2557 = vld [vmem:[%s3 + $0xb0] sm:$0xff]
  %v2558 = vld [vmem:[%s3 + $0xb8] sm:$0xff]
  %v2559 = vld [vmem:[%s3 + $0xc0] sm:$0xff]
  %v2560 = vld [vmem:[%s3 + $0xc8] sm:$0xff]
  %v2561 = vld [vmem:[%s3 + $0xd0] sm:$0xff]
  %v2562 = vld [vmem:[%s3 + $0xd8] sm:$0xff]
  %v2563 = vld [vmem:[%s3 + $0xe0] sm:$0xff]
  %v2564 = vld [vmem:[%s3 + $0xe8] sm:$0xff]
  %v2565 = vld [vmem:[%s3 + $0xf0] sm:$0xff]
  %v2566 = vld [vmem:[%s3 + $0xf8] sm:$0xff]
  %v2599 = vunpack.c.l.b16 %v2535
  %v2600 = vunpack.c.h.b16 %v2535
  %v2601 = vunpack.c.l.b16 %v2536
  %v2602 = vunpack.c.h.b16 %v2536
  %v2603 = vunpack.c.l.b16 %v2537
  %v2604 = vunpack.c.h.b16 %v2537
  %v2605 = vunpack.c.l.b16 %v2538
  %v2606 = vunpack.c.h.b16 %v2538
  %v2607 = vunpack.c.l.b16 %v2539
  %v2608 = vunpack.c.h.b16 %v2539
  %v2609 = vunpack.c.l.b16 %v2540
  %v2610 = vunpack.c.h.b16 %v2540
  %v2611 = vunpack.c.l.b16 %v2541
  %v2612 = vunpack.c.h.b16 %v2541
  %v2613 = vunpack.c.l.b16 %v2542
  %v2614 = vunpack.c.h.b16 %v2542
  %v2615 = vunpack.c.l.b16 %v2543
  %v2616 = vunpack.c.h.b16 %v2543
  %v2617 = vunpack.c.l.b16 %v2544
  %v2618 = vunpack.c.h.b16 %v2544
  %v2619 = vunpack.c.l.b16 %v2545
  %v2620 = vunpack.c.h.b16 %v2545
  %v2621 = vunpack.c.l.b16 %v2546
  %v2622 = vunpack.c.h.b16 %v2546
  %v2623 = vunpack.c.l.b16 %v2547
  %v2624 = vunpack.c.h.b16 %v2547
  %v2625 = vunpack.c.l.b16 %v2548
  %v2626 = vunpack.c.h.b16 %v2548
  %v2627 = vunpack.c.l.b16 %v2549
  %v2628 = vunpack.c.h.b16 %v2549
  %v2629 = vunpack.c.l.b16 %v2550
  %v2630 = vunpack.c.h.b16 %v2550
  %v2631 = vunpack.c.l.b16 %v2551
  %v2632 = vunpack.c.h.b16 %v2551
  %v2633 = vunpack.c.l.b16 %v2552
  %v2634 = vunpack.c.h.b16 %v2552
  %v2635 = vunpack.c.l.b16 %v2553
  %v2636 = vunpack.c.h.b16 %v2553
  %v2637 = vunpack.c.l.b16 %v2554
  %v2638 = vunpack.c.h.b16 %v2554
  %v2639 = vunpack.c.l.b16 %v2555
  %v2640 = vunpack.c.h.b16 %v2555
  %v2641 = vunpack.c.l.b16 %v2556
  %v2642 = vunpack.c.h.b16 %v2556
  %v2643 = vunpack.c.l.b16 %v2557
  %v2644 = vunpack.c.h.b16 %v2557
  %v2645 = vunpack.c.l.b16 %v2558
  %v2646 = vunpack.c.h.b16 %v2558
  %v2647 = vunpack.c.l.b16 %v2559
  %v2648 = vunpack.c.h.b16 %v2559
  %v2649 = vunpack.c.l.b16 %v2560
  %v2650 = vunpack.c.h.b16 %v2560
  %v2651 = vunpack.c.l.b16 %v2561
  %v2652 = vunpack.c.h.b16 %v2561
  %v2653 = vunpack.c.l.b16 %v2562
  %v2654 = vunpack.c.h.b16 %v2562
  %v2655 = vunpack.c.l.b16 %v2563
  %v2656 = vunpack.c.h.b16 %v2563
  %v2657 = vunpack.c.l.b16 %v2564
  %v2658 = vunpack.c.h.b16 %v2564
  %v2659 = vunpack.c.l.b16 %v2565
  %v2660 = vunpack.c.h.b16 %v2565
  %v2661 = vunpack.c.l.b16 %v2566
  %v2662 = vunpack.c.h.b16 %v2566
  %v2663 = vpack.c.b16 %v2603, %v2599
  %v2664 = vpack.c.b16 %v2604, %v2600
  %v2665 = vpack.c.b16 %v2605, %v2601
  %v2666 = vpack.c.b16 %v2606, %v2602
  %v2667 = vpack.c.b16 %v2611, %v2607
  %v2668 = vpack.c.b16 %v2612, %v2608
  %v2669 = vpack.c.b16 %v2613, %v2609
  %v2670 = vpack.c.b16 %v2614, %v2610
  %v2671 = vpack.c.b16 %v2619, %v2615
  %v2672 = vpack.c.b16 %v2620, %v2616
  %v2673 = vpack.c.b16 %v2621, %v2617
  %v2674 = vpack.c.b16 %v2622, %v2618
  %v2675 = vpack.c.b16 %v2627, %v2623
  %v2676 = vpack.c.b16 %v2628, %v2624
  %v2677 = vpack.c.b16 %v2629, %v2625
  %v2678 = vpack.c.b16 %v2630, %v2626
  %v2679 = vpack.c.b16 %v2635, %v2631
  %v2680 = vpack.c.b16 %v2636, %v2632
  %v2681 = vpack.c.b16 %v2637, %v2633
  %v2682 = vpack.c.b16 %v2638, %v2634
  %v2683 = vpack.c.b16 %v2643, %v2639
  %v2684 = vpack.c.b16 %v2644, %v2640
  %v2685 = vpack.c.b16 %v2645, %v2641
  %v2686 = vpack.c.b16 %v2646, %v2642
  %v2687 = vpack.c.b16 %v2651, %v2647
  %v2688 = vpack.c.b16 %v2652, %v2648
  %v2689 = vpack.c.b16 %v2653, %v2649
  %v2690 = vpack.c.b16 %v2654, %v2650
  %v2691 = vpack.c.b16 %v2659, %v2655
  %v2692 = vpack.c.b16 %v2660, %v2656
  %v2693 = vpack.c.b16 %v2661, %v2657
  %v2694 = vpack.c.b16 %v2662, %v2658
  %2727 = vmatpush.bf16.msra.mxu0 %v2691
  %2728 = vmatpush.bf16.msra.mxu0 %v2687
  %2729 = vmatpush.bf16.msra.mxu0 %v2683
  %2730 = vmatpush.bf16.msra.mxu0 %v2679
  %2731 = vmatpush.bf16.msra.mxu0 %v2675
  %2732 = vmatpush.bf16.msra.mxu0 %v2671
  %2733 = vmatpush.bf16.msra.mxu0 %v2667
  %2734 = vmatpush.bf16.msra.mxu0 %v2663
  %2735 = vmatmul.bf16.gmra.mxu0 %v2534
  %v2736 = vpop.f32.mrf.mxu0
  %v2737 = vadd.f32 0.0, %v2736
  %v2738 = vpop.f32.mrf.mxu0
  %2739 = vdwg.mxu0
  %2740 = vmatpush.bf16.msra.mxu0 %v2692
  %2741 = vmatpush.bf16.msra.mxu0 %v2688
  %2742 = vmatpush.bf16.msra.mxu0 %v2684
  %2743 = vmatpush.bf16.msra.mxu0 %v2680
  %2744 = vmatpush.bf16.msra.mxu0 %v2676
  %2745 = vmatpush.bf16.msra.mxu0 %v2672
  %2746 = vmatpush.bf16.msra.mxu0 %v2668
  %2747 = vmatpush.bf16.msra.mxu0 %v2664
  %2748 = vmatmul.bf16.gmra.mxu0 %v2534
  %v2749 = vpop.f32.mrf.mxu0
  %v2750 = vadd.f32 0.0, %v2749
  %v2751 = vpop.f32.mrf.mxu0
  %2752 = vdwg.mxu0
  %2753 = vmatpush.bf16.msra.mxu0 %v2693
  %2754 = vmatpush.bf16.msra.mxu0 %v2689
  %2755 = vmatpush.bf16.msra.mxu0 %v2685
  %2756 = vmatpush.bf16.msra.mxu0 %v2681
  %2757 = vmatpush.bf16.msra.mxu0 %v2677
  %2758 = vmatpush.bf16.msra.mxu0 %v2673
  %2759 = vmatpush.bf16.msra.mxu0 %v2669
  %2760 = vmatpush.bf16.msra.mxu0 %v2665
  %2761 = vmatmul.bf16.gmra.mxu0 %v2534
  %v2762 = vpop.f32.mrf.mxu0
  %v2763 = vadd.f32 0.0, %v2762
  %v2764 = vpop.f32.mrf.mxu0
  %2765 = vdwg.mxu0
  %2766 = vmatpush.bf16.msra.mxu0 %v2694
  %2767 = vmatpush.bf16.msra.mxu0 %v2690
  %2768 = vmatpush.bf16.msra.mxu0 %v2686
  %2769 = vmatpush.bf16.msra.mxu0 %v2682
  %2770 = vmatpush.bf16.msra.mxu0 %v2678
  %2771 = vmatpush.bf16.msra.mxu0 %v2674
  %2772 = vmatpush.bf16.msra.mxu0 %v2670
  %2773 = vmatpush.bf16.msra.mxu0 %v2666
  %2774 = vmatmul.bf16.gmra.mxu0 %v2534
  %v2775 = vpop.f32.mrf.mxu0
  %v2776 = vadd.f32 0.0, %v2775
  %v2777 = vpop.f32.mrf.mxu0
  %2778 = vdwg.mxu0
  %v2779 = vadd.f32 %v2530, %v2737
  %v2780 = vadd.f32 %v2531, %v2750
  %v2781 = vadd.f32 %v2532, %v2763
  %v2782 = vadd.f32 %v2533, %v2776
  %v2783 = vxor.u32 %v2779, 2147483648
  %v2784 = vmul.f32 %v2783, 1.442695
  %v2785 = vpow.pop %v2784
  %v2786 = vadd.f32 %v2785, 1.0
  %v2787 = vrcp.pop %v2786
  %v2788 = vmul.f32 %v2786, %v2787
  %v2789 = vsub.f32 1.0, %v2788
  %v2790 = vmul.f32 %v2787, %v2789
  %v2791 = vadd.f32 %v2787, %v2790
  %vm2792 = vweird.f32 %v2786
  %vm2793 = vweird.f32 %v2787
  %vm2794 = vmor %vm2792, %vm2793
  %v2795 = vsel %vm2794, %v2787, %v2791
  %v2796 = vand.u32 2147483647, %v2786
  %vm2797 = vcmp.eq.f32.partialorder %v2796, 8.507059e+37
  %v2798 = vand.u32 %v2786, 2147483648
  %v2799 = vor.u32 1.1754944e-38, %v2798
  %v2800 = vsel %vm2797, %v2799, %v2795
  %v2801 = vmul.f32 1.0, %v2800
  %v2802 = vxor.u32 %v2780, 2147483648
  %v2803 = vmul.f32 %v2802, 1.442695
  %v2804 = vpow.pop %v2803
  %v2805 = vadd.f32 %v2804, 1.0
  %v2806 = vrcp.pop %v2805
  %v2807 = vmul.f32 %v2805, %v2806
  %v2808 = vsub.f32 1.0, %v2807
  %v2809 = vmul.f32 %v2806, %v2808
  %v2810 = vadd.f32 %v2806, %v2809
  %vm2811 = vweird.f32 %v2805
  %vm2812 = vweird.f32 %v2806
  %vm2813 = vmor %vm2811, %vm2812
  %v2814 = vsel %vm2813, %v2806, %v2810
  %v2815 = vand.u32 2147483647, %v2805
  %vm2816 = vcmp.eq.f32.partialorder %v2815, 8.507059e+37
  %v2817 = vand.u32 %v2805, 2147483648
  %v2818 = vor.u32 1.1754944e-38, %v2817
  %v2819 = vsel %vm2816, %v2818, %v2814
  %v2820 = vmul.f32 1.0, %v2819
  %v2821 = vtanh.pop %v2781
  %v2822 = vxor.u32 %v2782, 2147483648
  %v2823 = vmul.f32 %v2822, 1.442695
  %v2824 = vpow.pop %v2823
  %v2825 = vadd.f32 %v2824, 1.0
  %v2826 = vrcp.pop %v2825
  %v2827 = vmul.f32 %v2825, %v2826
  %v2828 = vsub.f32 1.0, %v2827
  %v2829 = vmul.f32 %v2826, %v2828
  %v2830 = vadd.f32 %v2826, %v2829
  %vm2831 = vweird.f32 %v2825
  %vm2832 = vweird.f32 %v2826
  %vm2833 = vmor %vm2831, %vm2832
  %v2834 = vsel %vm2833, %v2826, %v2830
  %v2835 = vand.u32 2147483647, %v2825
  %vm2836 = vcmp.eq.f32.partialorder %v2835, 8.507059e+37
  %v2837 = vand.u32 %v2825, 2147483648
  %v2838 = vor.u32 1.1754944e-38, %v2837
  %v2839 = vsel %vm2836, %v2838, %v2834
  %v2840 = vmul.f32 1.0, %v2839
  %v2841 = vmul.f32 %v2820, %v2522
  %v2842 = vmul.f32 %v2801, %v2821
  %v2843 = vadd.f32 %v2841, %v2842
  %v2844 = vtanh.pop %v2843
  %v2845 = vmul.f32 %v2840, %v2844
  %s2846 = scalar_lea.vmem [#allocation3], 56
  %2847 = vst [vmem:[%s2846] sm:$0xff] %v2845
  %v2848 = vld [vmem:[#allocation3] sm:$0xff]
  %v2849 = vld [vmem:[#allocation3 + $0x8] sm:$0xff]
  %v2850 = vld [vmem:[#allocation3 + $0x10] sm:$0xff]
  %v2851 = vld [vmem:[#allocation3 + $0x18] sm:$0xff]
  %v2852 = vld [vmem:[#allocation3 + $0x20] sm:$0xff]
  %v2853 = vld [vmem:[#allocation3 + $0x28] sm:$0xff]
  %v2854 = vld [vmem:[#allocation3 + $0x30] sm:$0xff]
  %v2855 = vld [vmem:[#allocation3 + $0x38] sm:$0xff]
  %v2856 = vld [vmem:[%s4] sm:$0xff]
  %v2857 = vld [vmem:[%s4 + $0x8] sm:$0xff]
  %v2858 = vld [vmem:[%s4 + $0x10] sm:$0xff]
  %v2859 = vld [vmem:[%s4 + $0x18] sm:$0xff]
  %v2860 = vld [vmem:[%s4 + $0x20] sm:$0xff]
  %v2861 = vld [vmem:[%s4 + $0x28] sm:$0xff]
  %v2862 = vld [vmem:[%s4 + $0x30] sm:$0xff]
  %v2863 = vld [vmem:[%s4 + $0x38] sm:$0xff]
  %v2864 = vld [vmem:[%s4 + $0x40] sm:$0xff]
  %v2865 = vld [vmem:[%s4 + $0x48] sm:$0xff]
  %v2866 = vld [vmem:[%s4 + $0x50] sm:$0xff]
  %v2867 = vld [vmem:[%s4 + $0x58] sm:$0xff]
  %v2868 = vld [vmem:[%s4 + $0x60] sm:$0xff]
  %v2869 = vld [vmem:[%s4 + $0x68] sm:$0xff]
  %v2870 = vld [vmem:[%s4 + $0x70] sm:$0xff]
  %v2871 = vld [vmem:[%s4 + $0x78] sm:$0xff]
  %v2872 = vld [vmem:[#allocation4] sm:$0x1]
  %v2874 = vperm.slane %v2872, 0
  %2876 = vmatpush.msra.mxu0 %v2871
  %2877 = vmatpush.msra.mxu0 %v2870
  %2878 = vmatpush.msra.mxu0 %v2869
  %2879 = vmatpush.msra.mxu0 %v2868
  %2880 = vmatpush.msra.mxu0 %v2867
  %2881 = vmatpush.msra.mxu0 %v2866
  %2882 = vmatpush.msra.mxu0 %v2865
  %2883 = vmatpush.msra.mxu0 %v2864
  %2884 = vmatpush.msra.mxu0 %v2863
  %2885 = vmatpush.msra.mxu0 %v2862
  %2886 = vmatpush.msra.mxu0 %v2861
  %2887 = vmatpush.msra.mxu0 %v2860
  %2888 = vmatpush.msra.mxu0 %v2859
  %2889 = vmatpush.msra.mxu0 %v2858
  %2890 = vmatpush.msra.mxu0 %v2857
  %2891 = vmatpush.msra.mxu0 %v2856
  %2892 = vmatmul.f32.gmra.mxu0 %v2848
  %v2893 = vpop.f32.mrf.mxu0
  %v2894 = vadd.f32 %v2874, %v2893
  %2895 = vmatmul.f32.gmra.mxu0 %v2849
  %v2896 = vpop.f32.mrf.mxu0
  %v2897 = vadd.f32 %v2874, %v2896
  %2898 = vmatmul.f32.gmra.mxu0 %v2850
  %v2899 = vpop.f32.mrf.mxu0
  %v2900 = vadd.f32 %v2874, %v2899
  %2901 = vmatmul.f32.gmra.mxu0 %v2851
  %v2902 = vpop.f32.mrf.mxu0
  %v2903 = vadd.f32 %v2874, %v2902
  %2904 = vmatmul.f32.gmra.mxu0 %v2852
  %v2905 = vpop.f32.mrf.mxu0
  %v2906 = vadd.f32 %v2874, %v2905
  %2907 = vmatmul.f32.gmra.mxu0 %v2853
  %v2908 = vpop.f32.mrf.mxu0
  %v2909 = vadd.f32 %v2874, %v2908
  %2910 = vmatmul.f32.gmra.mxu0 %v2854
  %v2911 = vpop.f32.mrf.mxu0
  %v2912 = vadd.f32 %v2874, %v2911
  %2913 = vmatmul.f32.gmra.mxu0 %v2855
  %v2914 = vpop.f32.mrf.mxu0
  %v2915 = vadd.f32 %v2874, %v2914
  %2916 = vdwg.mxu0
  %vm2917 = vcmask 7168
  %2918 = vst.msk [vmem:[%s6] sm:$0xff] %vm2917, %v2894
  %2919 = vst.msk [vmem:[%s6 + $0x8] sm:$0xff] %vm2917, %v2897
  %2920 = vst.msk [vmem:[%s6 + $0x10] sm:$0xff] %vm2917, %v2900
  %2921 = vst.msk [vmem:[%s6 + $0x18] sm:$0xff] %vm2917, %v2903
  %2922 = vst.msk [vmem:[%s6 + $0x20] sm:$0xff] %vm2917, %v2906
  %2923 = vst.msk [vmem:[%s6 + $0x28] sm:$0xff] %vm2917, %v2909
  %2924 = vst.msk [vmem:[%s6 + $0x30] sm:$0xff] %vm2917, %v2912
  %2925 = vst.msk [vmem:[%s6 + $0x38] sm:$0xff] %vm2917, %v2915
  // Predicated region
  $region26: #{weld_lstm_forward.1} parent=0 // pred_check
    _
  $region27: #{weld_lstm_forward.1} parent=0 // pred_check_branch
    %2927 = sbr.rel (0) target = $region29
  $region28: #{weld_lstm_forward.1} parent=0 // pred_region
    _
  $region29: #{weld_lstm_forward.1} parent=0 // pred_fallthru
    _
  // Predicated region
  $region30: #{weld_lstm_forward.1} parent=0 // pred_check
    _
  $region31: #{weld_lstm_forward.1} parent=0 // pred_check_branch
    %2929 = sbr.rel (0) target = $region33
  $region32: #{weld_lstm_forward.1} parent=0 // pred_region
    _
  $region33: #{weld_lstm_forward.1} parent=0 // pred_fallthru
    _

</llo_original>
